<compile_context>
chip_gen: v5e
topology: v5e:2x2
jax: 0.10.0
libtpu: 0.0.40
codegen_flags: <defaults>
</compile_context>

<pallas_src>
import jax
import jax.numpy as jnp
from jax.experimental import pallas as pl
from jax.experimental.pallas import tpu as pltpu


_LANE = 128


def _round_up(x, m):
    return -(-x // m) * m


def _choose_block(N, P):
    """Samples per grid step: B_blk*P >= 128 (fills vreg sublanes / MXU M dim)
    and B_blk*P a multiple of 8 (sublane tiling constraint)."""
    b = max(1, -(-_LANE // P))
    while (b * P) % 8 != 0:
        b += 1
    return b, _round_up(N, b)


# ---------------- Pallas kernel 1: pairwise squared-distance matrix ----------------
def _make_dist_kernel(B_blk, Cc):
    use_vpu = Cc <= 8                                  # tiny contraction -> VPU outer products

    def kernel(pts_ref, d_ref):
        for b in range(B_blk):                         # static unroll over the batch block
            p = pts_ref[b].astype(jnp.float32)         # (P, Cc)
            r = jnp.sum(p * p, axis=1, keepdims=True)  # (P, 1)
            if use_vpu:
                a0 = p[:, 0:1]
                g = a0 * a0.T                          # (P, P) broadcast outer product
                for c in range(1, Cc):
                    a = p[:, c:c + 1]
                    g = g + a * a.T
            else:
                g = jax.lax.dot_general(p, p, (((1,), (1,)), ((), ())),
                                        preferred_element_type=jnp.float32)
            d_ref[b] = r - 2.0 * g + r.T
    return kernel


def pairwise_dist(pts, B_blk):
    """(N, P, Cc) -> (N, P, P) squared distances (N divisible by B_blk)."""
    N, P, Cc = pts.shape
    # TODO(synk): for large P, tile the (P, P) output (e.g. (B, TP, P) blocks) so it
    # fits v7x's smaller VMEM and adds a second parallel grid axis for the 2 TCs.
    return pl.pallas_call(
        _make_dist_kernel(B_blk, Cc),
        out_shape=jax.ShapeDtypeStruct((N, P, P), jnp.float32),
        grid=(N // B_blk,),
        in_specs=[pl.BlockSpec((B_blk, P, Cc), lambda n: (n, 0, 0))],
        out_specs=pl.BlockSpec((B_blk, P, P), lambda n: (n, 0, 0)),
        compiler_params=pltpu.CompilerParams(dimension_semantics=("parallel",)),
    )(pts)


# ---------------- Pallas kernel 2: in-kernel gather + edge MLP + mean-K + shortcut ----------------
def _make_edgeconv_kernel(K, n_layers, BP, M):
    def kernel(x_ref, gidx_ref, *refs):
        out_ref = refs[-1]
        params = refs[:-1]   # [W0sum, W0b, b0, W1, b1, ..., W_{L-1}, b_{L-1}, Ws, bs]

        x = x_ref[...].astype(jnp.float32)             # (BP, C_in) centre features
        gidx = gidx_ref[...]                           # (M, 1) int32 block-local neighbour rows

        # One-hot selection matrices (VPU iota + compare); the gather runs on the MXU.
        # Row r = (b*P + p)*K + k  ->  centre index q = r // K.
        col = jax.lax.broadcasted_iota(jnp.int32, (M, BP), 1)
        row = jax.lax.broadcasted_iota(jnp.int32, (M, BP), 0)
        nbr_sel = (col == gidx).astype(jnp.float32)                        # neighbour gather
        qk = col * K
        ctr_sel = ((row >= qk) & (row < qk + K)).astype(jnp.float32)       # repeat centre K times

        w0s = params[0][...]
        w0b = params[1][...]
        b0 = params[2][...]
        # [fc, fc - f] @ W0 == fc @ (Wa + Wb) - f @ Wb ; centre term hoisted out of K.
        c_term = jnp.dot(x, w0s, preferred_element_type=jnp.float32) + b0  # (BP, C0)
        f = jnp.dot(nbr_sel, x, preferred_element_type=jnp.float32)        # (M, C_in)
        h = jnp.maximum(
            jnp.dot(ctr_sel, c_term, preferred_element_type=jnp.float32)
            - jnp.dot(f, w0b, preferred_element_type=jnp.float32),
            0.0)                                                           # (M, C0)

        # Remaining [1x1 conv + folded BN + ReLU] layers: one matmul per layer.
        for i in range(1, n_layers):
            w = params[3 + 2 * (i - 1)][...]
            b = params[4 + 2 * (i - 1)][...]
            h = jnp.maximum(jnp.dot(h, w, preferred_element_type=jnp.float32) + b, 0.0)

        # Mean over the K neighbours as a pooling matmul (no reshapes).
        prow = jax.lax.broadcasted_iota(jnp.int32, (BP, M), 0) * K
        pcol = jax.lax.broadcasted_iota(jnp.int32, (BP, M), 1)
        pool = ((pcol >= prow) & (pcol < prow + K)).astype(jnp.float32) * (1.0 / K)
        mean_h = jnp.dot(pool, h, preferred_element_type=jnp.float32)      # (BP, C_out)

        # Shortcut 1x1 conv + folded BN, final ReLU. Lane-dense (padded) store.
        ws = params[-2][...]
        bs = params[-1][...]
        s = jnp.dot(x, ws, preferred_element_type=jnp.float32) + bs
        out_ref[...] = jnp.maximum(mean_h + s, 0.0)
    return kernel


def run_edge_mlp(x_flat, gidx, kparams, *, P, K, B_blk, n_layers):
    NP, C_in = x_flat.shape
    N_pad = NP // P
    BP = B_blk * P
    M = BP * K
    c_out_pad = kparams[-2].shape[1]

    in_specs = [
        pl.BlockSpec((BP, C_in), lambda n: (n, 0)),
        pl.BlockSpec((M, 1), lambda n: (n, 0)),
    ]
    in_specs += [pl.BlockSpec(p.shape, lambda n: (0, 0)) for p in kparams]

    return pl.pallas_call(
        _make_edgeconv_kernel(K, n_layers, BP, M),
        out_shape=jax.ShapeDtypeStruct((NP, c_out_pad), jnp.float32),
        grid=(N_pad // B_blk,),
        in_specs=in_specs,
        out_specs=pl.BlockSpec((BP, c_out_pad), lambda n: (n, 0)),
        compiler_params=pltpu.CompilerParams(dimension_semantics=("parallel",)),
    )(x_flat, gidx, *kparams)


# ---------------- parameter preprocessing for the kernel ----------------
def _pad2d(a, rows, cols):
    return jnp.pad(a, ((0, rows - a.shape[0]), (0, cols - a.shape[1])))


def prepare_kernel_params(params_flat):
    """Split layer-0 weights (removes the edge-feature concat) and zero-pad all
    layer widths to multiples of 128 lanes (lane-dense intermediates / stores)."""
    n_layers = (len(params_flat) - 2) // 2
    W0, b0 = params_flat[0], params_flat[1]
    C_in = W0.shape[0] // 2
    c0p = _round_up(W0.shape[1], _LANE)
    Wa, Wb = W0[:C_in], W0[C_in:]
    kp = [_pad2d(Wa + Wb, C_in, c0p),
          _pad2d(Wb, C_in, c0p),
          _pad2d(b0.reshape(1, -1), 1, c0p)]
    prev_p = c0p
    for i in range(1, n_layers):
        W, b = params_flat[2 * i], params_flat[2 * i + 1]
        cip = _round_up(W.shape[1], _LANE)
        kp += [_pad2d(W, prev_p, cip), _pad2d(b.reshape(1, -1), 1, cip)]
        prev_p = cip
    Ws, bs = params_flat[-2], params_flat[-1]
    csp = _round_up(Ws.shape[1], _LANE)
    kp += [_pad2d(Ws, Ws.shape[0], csp), _pad2d(bs.reshape(1, -1), 1, csp)]
    return kp


# ---------------- deterministic parameter init (eval-mode BN folded into 1x1 convs) ----------------
def _fold_bn(W, b, cout, eps=1e-5):
    gamma = 1.0 + 0.1 * jnp.arange(cout, dtype=jnp.float32) / cout
    beta = 0.05 * jnp.ones((cout,), jnp.float32)
    mean = jnp.zeros((cout,), jnp.float32)
    var = jnp.ones((cout,), jnp.float32)
    s = gamma * jax.lax.rsqrt(var + eps)
    return W * s[None, :], ((b - mean) * s + beta)[None, :]


def init_params(key, channel_list):
    params = []
    keys = jax.random.split(key, 2 * len(channel_list) + 2)
    for i, (cin, cout) in enumerate(channel_list):
        in_dim = cin * 2 if i == 0 else cin
        W = jax.random.normal(keys[2 * i], (in_dim, cout), jnp.float32) / jnp.sqrt(in_dim)
        b = 0.01 * jax.random.normal(keys[2 * i + 1], (cout,), jnp.float32)
        Wf, bf = _fold_bn(W, b, cout)
        params += [Wf, bf]
    cin_s, cout_s = channel_list[0][0], channel_list[-1][-1]
    Ws = jax.random.normal(keys[-2], (cin_s, cout_s), jnp.float32) / jnp.sqrt(cin_s)
    bs = 0.01 * jax.random.normal(keys[-1], (cout_s,), jnp.float32)
    Wsf, bsf = _fold_bn(Ws, bs, cout_s)
    params += [Wsf, bsf]
    return params


# ---------------- full Edge_Conv forward ----------------
def edge_conv_forward(features, params_flat, *, index, K, n_layers):
    if index != 0:
        features = jnp.transpose(features, (0, 2, 1))       # (N, C, P) -> (N, P, C)
    X = features
    pts = X[:, :, 0:2] if index == 0 else X
    X = X[:, :, 2:] if index == 0 else X
    N, P, C_in = X.shape
    c_last = params_flat[-2].shape[-1]

    B_blk, N_pad = _choose_block(N, P)
    if N_pad != N:                                           # pad batch to whole blocks
        pad = ((0, N_pad - N), (0, 0), (0, 0))
        pts = jnp.pad(pts, pad)
        X = jnp.pad(X, pad)

    # kNN: distance matrix in Pallas; top-k neighbour selection stays in JAX.
    dist = pairwise_dist(pts, B_blk)                         # (N_pad, P, P)
    # TODO(synk): top-k neighbour selection has no clean Pallas TPU primitive; stays in JAX.
    _, idx = jax.lax.top_k(-dist, K + 1)
    knn = idx[:, :, 1:].astype(jnp.int32)                    # (N_pad, P, K), drop self

    # Block-local row indices for the in-kernel one-hot gather (no HBM neighbour
    # tensor, no transpose): value = (n % B_blk)*P + knn[n, p, k].
    boff = (jnp.arange(N_pad, dtype=jnp.int32) % B_blk) * P
    gidx = (knn + boff[:, None, None]).reshape(N_pad * P * K, 1)

    x_flat = X.reshape(N_pad * P, C_in)
    kparams = prepare_kernel_params(params_flat)
    out_flat = run_edge_mlp(x_flat, gidx, kparams, P=P, K=K, B_blk=B_blk,
                            n_layers=n_layers)               # (N_pad*P, c_last_pad)
    out = out_flat.reshape(N_pad, P, -1)[:N, :, :c_last]     # drop batch + lane padding
    return jnp.transpose(out, (0, 2, 1))                     # (N, C_out, P) like PyTorch


# ---------------- pure-JAX reference (mirrors the PyTorch module, unpadded params) ----------------
def reference_forward(features, params_flat, *, index, K, n_layers):
    if index != 0:
        features = jnp.transpose(features, (0, 2, 1))
    X = features
    pts = X[:, :, 0:2] if index == 0 else X
    X = X[:, :, 2:] if index == 0 else X
    rA = jnp.sum(pts * pts, axis=2, keepdims=True)
    d = rA - 2.0 * jnp.einsum('npc,nqc->npq', pts, pts) + jnp.transpose(rA, (0, 2, 1))
    _, idx = jax.lax.top_k(-d, K + 1)
    knn_index = idx[:, :, 1:]
    f = jnp.take_along_axis(X[:, :, None, :], knn_index[:, :, :, None], axis=1)
    fc = jnp.broadcast_to(X[:, :, None, :], f.shape)
    h = jnp.concatenate([fc, fc - f], axis=-1)               # [centre, centre - neighbour] (as in PyTorch)
    for i in range(n_layers):
        h = jnp.maximum(h @ params_flat[2 * i] + params_flat[2 * i + 1], 0.0)
    h = jnp.mean(h, axis=2)
    s = X @ params_flat[-2] + params_flat[-1]
    return jnp.transpose(jnp.maximum(h + s, 0.0), (0, 2, 1))


if __name__ == "__main__":
    # Edge_Conv(index=0, edge_conv_parameters=(3, [(4, 32), (32, 32), (32, 32)]))
    index = 0
    K = 3
    channel_list = [(4, 32), (32, 32), (32, 32)]
    n_layers = len(channel_list)

    N, P = 2, 16
    C_total = 2 + channel_list[0][0]                         # 2 coords + 4 feature channels

    key = jax.random.PRNGKey(0)
    k_feat, k_par = jax.random.split(key)
    features = jax.random.normal(k_feat, (N, P, C_total), jnp.float32)
    params_flat = init_params(k_par, channel_list)

    out = edge_conv_forward(features, params_flat, index=index, K=K, n_layers=n_layers)
    out = jax.block_until_ready(out)

    ref = reference_forward(features, params_flat, index=index, K=K, n_layers=n_layers)
    assert out.shape == (N, channel_list[-1][-1], P), out.shape
    err = float(jnp.max(jnp.abs(out - ref)))
    assert jnp.allclose(out, ref, atol=2e-4, rtol=2e-4), err

    print("KERNEL_OK")
</pallas_src>

<mosaic_0001>
module attributes {stable_mosaic.version = 11 : i64} {
  func.func @kernel(%arg0: i32, %arg1: memref<8x16x2xf32, #tpu.memory_space<vmem>>, %arg2: memref<8x16x16xf32, #tpu.memory_space<vmem>>) attributes {dimension_semantics = [#tpu.dimension_semantics<parallel>], iteration_bounds = array<i64: 1>, scalar_prefetch = 0 : i64, scratch_operands = 0 : i64, tpu.core_type = #tpu.core_type<tc>, window_params = [{transform_indices = @transform_0, window_bounds = array<i64: 8, 16, 2>}, {transform_indices = @transform_1, window_bounds = array<i64: 8, 16, 16>}]} {
    %c0 = arith.constant 0 : index
    %c0_0 = arith.constant 0 : index
    %c0_1 = arith.constant 0 : index
    %0 = vector.load %arg1[%c0, %c0_0, %c0_1] : memref<8x16x2xf32, #tpu.memory_space<vmem>>, vector<1x16x2xf32>
    %1 = vector.shape_cast %0 : vector<1x16x2xf32> to vector<16x2xf32>
    %2 = arith.mulf %1, %1 : vector<16x2xf32>
    %cst = arith.constant dense<0.000000e+00> : vector<16xf32>
    %3 = vector.multi_reduction <add>, %2, %cst [1] : vector<16x2xf32> to vector<16xf32>
    %4 = vector.shape_cast %3 : vector<16xf32> to vector<16x1xf32>
    %5 = vector.extract_strided_slice %1 {offsets = [0, 0], sizes = [16, 1], strides = [1, 1]} : vector<16x2xf32> to vector<16x1xf32>
    %6 = tpu.transpose %5, [1, 0] : vector<16x1xf32> -> vector<1x16xf32>
    %7 = vector.broadcast %5 : vector<16x1xf32> to vector<16x16xf32>
    %8 = vector.broadcast %6 : vector<1x16xf32> to vector<16x16xf32>
    %9 = arith.mulf %7, %8 : vector<16x16xf32>
    %10 = vector.extract_strided_slice %1 {offsets = [0, 1], sizes = [16, 1], strides = [1, 1]} : vector<16x2xf32> to vector<16x1xf32>
    %11 = tpu.transpose %10, [1, 0] : vector<16x1xf32> -> vector<1x16xf32>
    %12 = vector.broadcast %10 : vector<16x1xf32> to vector<16x16xf32>
    %13 = vector.broadcast %11 : vector<1x16xf32> to vector<16x16xf32>
    %14 = arith.mulf %12, %13 : vector<16x16xf32>
    %15 = arith.addf %9, %14 : vector<16x16xf32>
    %cst_2 = arith.constant 2.000000e+00 : f32
    %16 = vector.broadcast %cst_2 : f32 to vector<16x16xf32>
    %17 = arith.mulf %16, %15 : vector<16x16xf32>
    %18 = vector.broadcast %4 : vector<16x1xf32> to vector<16x16xf32>
    %19 = arith.subf %18, %17 : vector<16x16xf32>
    %20 = tpu.transpose %4, [1, 0] : vector<16x1xf32> -> vector<1x16xf32>
    %21 = vector.broadcast %20 : vector<1x16xf32> to vector<16x16xf32>
    %22 = arith.addf %19, %21 : vector<16x16xf32>
    %c0_3 = arith.constant 0 : index
    %c0_4 = arith.constant 0 : index
    %c0_5 = arith.constant 0 : index
    %23 = vector.load %arg2[%c0_3, %c0_4, %c0_5] : memref<8x16x16xf32, #tpu.memory_space<vmem>>, vector<1x16x16xf32>
    %24 = vector.shape_cast %23 : vector<1x16x16xf32> to vector<16x16xf32>
    %25 = vector.shape_cast %22 : vector<16x16xf32> to vector<1x16x16xf32>
    tpu.vector_store %arg2[%c0_3, %c0_4, %c0_5], %25 {strides = array<i32>} : memref<8x16x16xf32, #tpu.memory_space<vmem>>, vector<1x16x16xf32>,
    %c1 = arith.constant 1 : index
    %c0_6 = arith.constant 0 : index
    %c0_7 = arith.constant 0 : index
    %26 = vector.load %arg1[%c1, %c0_6, %c0_7] : memref<8x16x2xf32, #tpu.memory_space<vmem>>, vector<1x16x2xf32>
    %27 = vector.shape_cast %26 : vector<1x16x2xf32> to vector<16x2xf32>
    %28 = arith.mulf %27, %27 : vector<16x2xf32>
    %cst_8 = arith.constant dense<0.000000e+00> : vector<16xf32>
    %29 = vector.multi_reduction <add>, %28, %cst_8 [1] : vector<16x2xf32> to vector<16xf32>
    %30 = vector.shape_cast %29 : vector<16xf32> to vector<16x1xf32>
    %31 = vector.extract_strided_slice %27 {offsets = [0, 0], sizes = [16, 1], strides = [1, 1]} : vector<16x2xf32> to vector<16x1xf32>
    %32 = tpu.transpose %31, [1, 0] : vector<16x1xf32> -> vector<1x16xf32>
    %33 = vector.broadcast %31 : vector<16x1xf32> to vector<16x16xf32>
    %34 = vector.broadcast %32 : vector<1x16xf32> to vector<16x16xf32>
    %35 = arith.mulf %33, %34 : vector<16x16xf32>
    %36 = vector.extract_strided_slice %27 {offsets = [0, 1], sizes = [16, 1], strides = [1, 1]} : vector<16x2xf32> to vector<16x1xf32>
    %37 = tpu.transpose %36, [1, 0] : vector<16x1xf32> -> vector<1x16xf32>
    %38 = vector.broadcast %36 : vector<16x1xf32> to vector<16x16xf32>
    %39 = vector.broadcast %37 : vector<1x16xf32> to vector<16x16xf32>
    %40 = arith.mulf %38, %39 : vector<16x16xf32>
    %41 = arith.addf %35, %40 : vector<16x16xf32>
    %cst_9 = arith.constant 2.000000e+00 : f32
    %42 = vector.broadcast %cst_9 : f32 to vector<16x16xf32>
    %43 = arith.mulf %42, %41 : vector<16x16xf32>
    %44 = vector.broadcast %30 : vector<16x1xf32> to vector<16x16xf32>
    %45 = arith.subf %44, %43 : vector<16x16xf32>
    %46 = tpu.transpose %30, [1, 0] : vector<16x1xf32> -> vector<1x16xf32>
    %47 = vector.broadcast %46 : vector<1x16xf32> to vector<16x16xf32>
    %48 = arith.addf %45, %47 : vector<16x16xf32>
    %c1_10 = arith.constant 1 : index
    %c0_11 = arith.constant 0 : index
    %c0_12 = arith.constant 0 : index
    %49 = vector.load %arg2[%c1_10, %c0_11, %c0_12] : memref<8x16x16xf32, #tpu.memory_space<vmem>>, vector<1x16x16xf32>
    %50 = vector.shape_cast %49 : vector<1x16x16xf32> to vector<16x16xf32>
    %51 = vector.shape_cast %48 : vector<16x16xf32> to vector<1x16x16xf32>
    tpu.vector_store %arg2[%c1_10, %c0_11, %c0_12], %51 {strides = array<i32>} : memref<8x16x16xf32, #tpu.memory_space<vmem>>, vector<1x16x16xf32>,
    %c2 = arith.constant 2 : index
    %c0_13 = arith.constant 0 : index
    %c0_14 = arith.constant 0 : index
    %52 = vector.load %arg1[%c2, %c0_13, %c0_14] : memref<8x16x2xf32, #tpu.memory_space<vmem>>, vector<1x16x2xf32>
    %53 = vector.shape_cast %52 : vector<1x16x2xf32> to vector<16x2xf32>
    %54 = arith.mulf %53, %53 : vector<16x2xf32>
    %cst_15 = arith.constant dense<0.000000e+00> : vector<16xf32>
    %55 = vector.multi_reduction <add>, %54, %cst_15 [1] : vector<16x2xf32> to vector<16xf32>
    %56 = vector.shape_cast %55 : vector<16xf32> to vector<16x1xf32>
    %57 = vector.extract_strided_slice %53 {offsets = [0, 0], sizes = [16, 1], strides = [1, 1]} : vector<16x2xf32> to vector<16x1xf32>
    %58 = tpu.transpose %57, [1, 0] : vector<16x1xf32> -> vector<1x16xf32>
    %59 = vector.broadcast %57 : vector<16x1xf32> to vector<16x16xf32>
    %60 = vector.broadcast %58 : vector<1x16xf32> to vector<16x16xf32>
    %61 = arith.mulf %59, %60 : vector<16x16xf32>
    %62 = vector.extract_strided_slice %53 {offsets = [0, 1], sizes = [16, 1], strides = [1, 1]} : vector<16x2xf32> to vector<16x1xf32>
    %63 = tpu.transpose %62, [1, 0] : vector<16x1xf32> -> vector<1x16xf32>
    %64 = vector.broadcast %62 : vector<16x1xf32> to vector<16x16xf32>
    %65 = vector.broadcast %63 : vector<1x16xf32> to vector<16x16xf32>
    %66 = arith.mulf %64, %65 : vector<16x16xf32>
    %67 = arith.addf %61, %66 : vector<16x16xf32>
    %cst_16 = arith.constant 2.000000e+00 : f32
    %68 = vector.broadcast %cst_16 : f32 to vector<16x16xf32>
    %69 = arith.mulf %68, %67 : vector<16x16xf32>
    %70 = vector.broadcast %56 : vector<16x1xf32> to vector<16x16xf32>
    %71 = arith.subf %70, %69 : vector<16x16xf32>
    %72 = tpu.transpose %56, [1, 0] : vector<16x1xf32> -> vector<1x16xf32>
    %73 = vector.broadcast %72 : vector<1x16xf32> to vector<16x16xf32>
    %74 = arith.addf %71, %73 : vector<16x16xf32>
    %c2_17 = arith.constant 2 : index
    %c0_18 = arith.constant 0 : index
    %c0_19 = arith.constant 0 : index
    %75 = vector.load %arg2[%c2_17, %c0_18, %c0_19] : memref<8x16x16xf32, #tpu.memory_space<vmem>>, vector<1x16x16xf32>
    %76 = vector.shape_cast %75 : vector<1x16x16xf32> to vector<16x16xf32>
    %77 = vector.shape_cast %74 : vector<16x16xf32> to vector<1x16x16xf32>
    tpu.vector_store %arg2[%c2_17, %c0_18, %c0_19], %77 {strides = array<i32>} : memref<8x16x16xf32, #tpu.memory_space<vmem>>, vector<1x16x16xf32>,
    %c3 = arith.constant 3 : index
    %c0_20 = arith.constant 0 : index
    %c0_21 = arith.constant 0 : index
    %78 = vector.load %arg1[%c3, %c0_20, %c0_21] : memref<8x16x2xf32, #tpu.memory_space<vmem>>, vector<1x16x2xf32>
    %79 = vector.shape_cast %78 : vector<1x16x2xf32> to vector<16x2xf32>
    %80 = arith.mulf %79, %79 : vector<16x2xf32>
    %cst_22 = arith.constant dense<0.000000e+00> : vector<16xf32>
    %81 = vector.multi_reduction <add>, %80, %cst_22 [1] : vector<16x2xf32> to vector<16xf32>
    %82 = vector.shape_cast %81 : vector<16xf32> to vector<16x1xf32>
    %83 = vector.extract_strided_slice %79 {offsets = [0, 0], sizes = [16, 1], strides = [1, 1]} : vector<16x2xf32> to vector<16x1xf32>
    %84 = tpu.transpose %83, [1, 0] : vector<16x1xf32> -> vector<1x16xf32>
    %85 = vector.broadcast %83 : vector<16x1xf32> to vector<16x16xf32>
    %86 = vector.broadcast %84 : vector<1x16xf32> to vector<16x16xf32>
    %87 = arith.mulf %85, %86 : vector<16x16xf32>
    %88 = vector.extract_strided_slice %79 {offsets = [0, 1], sizes = [16, 1], strides = [1, 1]} : vector<16x2xf32> to vector<16x1xf32>
    %89 = tpu.transpose %88, [1, 0] : vector<16x1xf32> -> vector<1x16xf32>
    %90 = vector.broadcast %88 : vector<16x1xf32> to vector<16x16xf32>
    %91 = vector.broadcast %89 : vector<1x16xf32> to vector<16x16xf32>
    %92 = arith.mulf %90, %91 : vector<16x16xf32>
    %93 = arith.addf %87, %92 : vector<16x16xf32>
    %cst_23 = arith.constant 2.000000e+00 : f32
    %94 = vector.broadcast %cst_23 : f32 to vector<16x16xf32>
    %95 = arith.mulf %94, %93 : vector<16x16xf32>
    %96 = vector.broadcast %82 : vector<16x1xf32> to vector<16x16xf32>
    %97 = arith.subf %96, %95 : vector<16x16xf32>
    %98 = tpu.transpose %82, [1, 0] : vector<16x1xf32> -> vector<1x16xf32>
    %99 = vector.broadcast %98 : vector<1x16xf32> to vector<16x16xf32>
    %100 = arith.addf %97, %99 : vector<16x16xf32>
    %c3_24 = arith.constant 3 : index
    %c0_25 = arith.constant 0 : index
    %c0_26 = arith.constant 0 : index
    %101 = vector.load %arg2[%c3_24, %c0_25, %c0_26] : memref<8x16x16xf32, #tpu.memory_space<vmem>>, vector<1x16x16xf32>
    %102 = vector.shape_cast %101 : vector<1x16x16xf32> to vector<16x16xf32>
    %103 = vector.shape_cast %100 : vector<16x16xf32> to vector<1x16x16xf32>
    tpu.vector_store %arg2[%c3_24, %c0_25, %c0_26], %103 {strides = array<i32>} : memref<8x16x16xf32, #tpu.memory_space<vmem>>, vector<1x16x16xf32>,
    %c4 = arith.constant 4 : index
    %c0_27 = arith.constant 0 : index
    %c0_28 = arith.constant 0 : index
    %104 = vector.load %arg1[%c4, %c0_27, %c0_28] : memref<8x16x2xf32, #tpu.memory_space<vmem>>, vector<1x16x2xf32>
    %105 = vector.shape_cast %104 : vector<1x16x2xf32> to vector<16x2xf32>
    %106 = arith.mulf %105, %105 : vector<16x2xf32>
    %cst_29 = arith.constant dense<0.000000e+00> : vector<16xf32>
    %107 = vector.multi_reduction <add>, %106, %cst_29 [1] : vector<16x2xf32> to vector<16xf32>
    %108 = vector.shape_cast %107 : vector<16xf32> to vector<16x1xf32>
    %109 = vector.extract_strided_slice %105 {offsets = [0, 0], sizes = [16, 1], strides = [1, 1]} : vector<16x2xf32> to vector<16x1xf32>
    %110 = tpu.transpose %109, [1, 0] : vector<16x1xf32> -> vector<1x16xf32>
    %111 = vector.broadcast %109 : vector<16x1xf32> to vector<16x16xf32>
    %112 = vector.broadcast %110 : vector<1x16xf32> to vector<16x16xf32>
    %113 = arith.mulf %111, %112 : vector<16x16xf32>
    %114 = vector.extract_strided_slice %105 {offsets = [0, 1], sizes = [16, 1], strides = [1, 1]} : vector<16x2xf32> to vector<16x1xf32>
    %115 = tpu.transpose %114, [1, 0] : vector<16x1xf32> -> vector<1x16xf32>
    %116 = vector.broadcast %114 : vector<16x1xf32> to vector<16x16xf32>
    %117 = vector.broadcast %115 : vector<1x16xf32> to vector<16x16xf32>
    %118 = arith.mulf %116, %117 : vector<16x16xf32>
    %119 = arith.addf %113, %118 : vector<16x16xf32>
    %cst_30 = arith.constant 2.000000e+00 : f32
    %120 = vector.broadcast %cst_30 : f32 to vector<16x16xf32>
    %121 = arith.mulf %120, %119 : vector<16x16xf32>
    %122 = vector.broadcast %108 : vector<16x1xf32> to vector<16x16xf32>
    %123 = arith.subf %122, %121 : vector<16x16xf32>
    %124 = tpu.transpose %108, [1, 0] : vector<16x1xf32> -> vector<1x16xf32>
    %125 = vector.broadcast %124 : vector<1x16xf32> to vector<16x16xf32>
    %126 = arith.addf %123, %125 : vector<16x16xf32>
    %c4_31 = arith.constant 4 : index
    %c0_32 = arith.constant 0 : index
    %c0_33 = arith.constant 0 : index
    %127 = vector.load %arg2[%c4_31, %c0_32, %c0_33] : memref<8x16x16xf32, #tpu.memory_space<vmem>>, vector<1x16x16xf32>
    %128 = vector.shape_cast %127 : vector<1x16x16xf32> to vector<16x16xf32>
    %129 = vector.shape_cast %126 : vector<16x16xf32> to vector<1x16x16xf32>
    tpu.vector_store %arg2[%c4_31, %c0_32, %c0_33], %129 {strides = array<i32>} : memref<8x16x16xf32, #tpu.memory_space<vmem>>, vector<1x16x16xf32>,
    %c5 = arith.constant 5 : index
    %c0_34 = arith.constant 0 : index
    %c0_35 = arith.constant 0 : index
    %130 = vector.load %arg1[%c5, %c0_34, %c0_35] : memref<8x16x2xf32, #tpu.memory_space<vmem>>, vector<1x16x2xf32>
    %131 = vector.shape_cast %130 : vector<1x16x2xf32> to vector<16x2xf32>
    %132 = arith.mulf %131, %131 : vector<16x2xf32>
    %cst_36 = arith.constant dense<0.000000e+00> : vector<16xf32>
    %133 = vector.multi_reduction <add>, %132, %cst_36 [1] : vector<16x2xf32> to vector<16xf32>
    %134 = vector.shape_cast %133 : vector<16xf32> to vector<16x1xf32>
    %135 = vector.extract_strided_slice %131 {offsets = [0, 0], sizes = [16, 1], strides = [1, 1]} : vector<16x2xf32> to vector<16x1xf32>
    %136 = tpu.transpose %135, [1, 0] : vector<16x1xf32> -> vector<1x16xf32>
    %137 = vector.broadcast %135 : vector<16x1xf32> to vector<16x16xf32>
    %138 = vector.broadcast %136 : vector<1x16xf32> to vector<16x16xf32>
    %139 = arith.mulf %137, %138 : vector<16x16xf32>
    %140 = vector.extract_strided_slice %131 {offsets = [0, 1], sizes = [16, 1], strides = [1, 1]} : vector<16x2xf32> to vector<16x1xf32>
    %141 = tpu.transpose %140, [1, 0] : vector<16x1xf32> -> vector<1x16xf32>
    %142 = vector.broadcast %140 : vector<16x1xf32> to vector<16x16xf32>
    %143 = vector.broadcast %141 : vector<1x16xf32> to vector<16x16xf32>
    %144 = arith.mulf %142, %143 : vector<16x16xf32>
    %145 = arith.addf %139, %144 : vector<16x16xf32>
    %cst_37 = arith.constant 2.000000e+00 : f32
    %146 = vector.broadcast %cst_37 : f32 to vector<16x16xf32>
    %147 = arith.mulf %146, %145 : vector<16x16xf32>
    %148 = vector.broadcast %134 : vector<16x1xf32> to vector<16x16xf32>
    %149 = arith.subf %148, %147 : vector<16x16xf32>
    %150 = tpu.transpose %134, [1, 0] : vector<16x1xf32> -> vector<1x16xf32>
    %151 = vector.broadcast %150 : vector<1x16xf32> to vector<16x16xf32>
    %152 = arith.addf %149, %151 : vector<16x16xf32>
    %c5_38 = arith.constant 5 : index
    %c0_39 = arith.constant 0 : index
    %c0_40 = arith.constant 0 : index
    %153 = vector.load %arg2[%c5_38, %c0_39, %c0_40] : memref<8x16x16xf32, #tpu.memory_space<vmem>>, vector<1x16x16xf32>
    %154 = vector.shape_cast %153 : vector<1x16x16xf32> to vector<16x16xf32>
    %155 = vector.shape_cast %152 : vector<16x16xf32> to vector<1x16x16xf32>
    tpu.vector_store %arg2[%c5_38, %c0_39, %c0_40], %155 {strides = array<i32>} : memref<8x16x16xf32, #tpu.memory_space<vmem>>, vector<1x16x16xf32>,
    %c6 = arith.constant 6 : index
    %c0_41 = arith.constant 0 : index
    %c0_42 = arith.constant 0 : index
    %156 = vector.load %arg1[%c6, %c0_41, %c0_42] : memref<8x16x2xf32, #tpu.memory_space<vmem>>, vector<1x16x2xf32>
    %157 = vector.shape_cast %156 : vector<1x16x2xf32> to vector<16x2xf32>
    %158 = arith.mulf %157, %157 : vector<16x2xf32>
    %cst_43 = arith.constant dense<0.000000e+00> : vector<16xf32>
    %159 = vector.multi_reduction <add>, %158, %cst_43 [1] : vector<16x2xf32> to vector<16xf32>
    %160 = vector.shape_cast %159 : vector<16xf32> to vector<16x1xf32>
    %161 = vector.extract_strided_slice %157 {offsets = [0, 0], sizes = [16, 1], strides = [1, 1]} : vector<16x2xf32> to vector<16x1xf32>
    %162 = tpu.transpose %161, [1, 0] : vector<16x1xf32> -> vector<1x16xf32>
    %163 = vector.broadcast %161 : vector<16x1xf32> to vector<16x16xf32>
    %164 = vector.broadcast %162 : vector<1x16xf32> to vector<16x16xf32>
    %165 = arith.mulf %163, %164 : vector<16x16xf32>
    %166 = vector.extract_strided_slice %157 {offsets = [0, 1], sizes = [16, 1], strides = [1, 1]} : vector<16x2xf32> to vector<16x1xf32>
    %167 = tpu.transpose %166, [1, 0] : vector<16x1xf32> -> vector<1x16xf32>
    %168 = vector.broadcast %166 : vector<16x1xf32> to vector<16x16xf32>
    %169 = vector.broadcast %167 : vector<1x16xf32> to vector<16x16xf32>
    %170 = arith.mulf %168, %169 : vector<16x16xf32>
    %171 = arith.addf %165, %170 : vector<16x16xf32>
    %cst_44 = arith.constant 2.000000e+00 : f32
    %172 = vector.broadcast %cst_44 : f32 to vector<16x16xf32>
    %173 = arith.mulf %172, %171 : vector<16x16xf32>
    %174 = vector.broadcast %160 : vector<16x1xf32> to vector<16x16xf32>
    %175 = arith.subf %174, %173 : vector<16x16xf32>
    %176 = tpu.transpose %160, [1, 0] : vector<16x1xf32> -> vector<1x16xf32>
    %177 = vector.broadcast %176 : vector<1x16xf32> to vector<16x16xf32>
    %178 = arith.addf %175, %177 : vector<16x16xf32>
    %c6_45 = arith.constant 6 : index
    %c0_46 = arith.constant 0 : index
    %c0_47 = arith.constant 0 : index
    %179 = vector.load %arg2[%c6_45, %c0_46, %c0_47] : memref<8x16x16xf32, #tpu.memory_space<vmem>>, vector<1x16x16xf32>
    %180 = vector.shape_cast %179 : vector<1x16x16xf32> to vector<16x16xf32>
    %181 = vector.shape_cast %178 : vector<16x16xf32> to vector<1x16x16xf32>
    tpu.vector_store %arg2[%c6_45, %c0_46, %c0_47], %181 {strides = array<i32>} : memref<8x16x16xf32, #tpu.memory_space<vmem>>, vector<1x16x16xf32>,
    %c7 = arith.constant 7 : index
    %c0_48 = arith.constant 0 : index
    %c0_49 = arith.constant 0 : index
    %182 = vector.load %arg1[%c7, %c0_48, %c0_49] : memref<8x16x2xf32, #tpu.memory_space<vmem>>, vector<1x16x2xf32>
    %183 = vector.shape_cast %182 : vector<1x16x2xf32> to vector<16x2xf32>
    %184 = arith.mulf %183, %183 : vector<16x2xf32>
    %cst_50 = arith.constant dense<0.000000e+00> : vector<16xf32>
    %185 = vector.multi_reduction <add>, %184, %cst_50 [1] : vector<16x2xf32> to vector<16xf32>
    %186 = vector.shape_cast %185 : vector<16xf32> to vector<16x1xf32>
    %187 = vector.extract_strided_slice %183 {offsets = [0, 0], sizes = [16, 1], strides = [1, 1]} : vector<16x2xf32> to vector<16x1xf32>
    %188 = tpu.transpose %187, [1, 0] : vector<16x1xf32> -> vector<1x16xf32>
    %189 = vector.broadcast %187 : vector<16x1xf32> to vector<16x16xf32>
    %190 = vector.broadcast %188 : vector<1x16xf32> to vector<16x16xf32>
    %191 = arith.mulf %189, %190 : vector<16x16xf32>
    %192 = vector.extract_strided_slice %183 {offsets = [0, 1], sizes = [16, 1], strides = [1, 1]} : vector<16x2xf32> to vector<16x1xf32>
    %193 = tpu.transpose %192, [1, 0] : vector<16x1xf32> -> vector<1x16xf32>
    %194 = vector.broadcast %192 : vector<16x1xf32> to vector<16x16xf32>
    %195 = vector.broadcast %193 : vector<1x16xf32> to vector<16x16xf32>
    %196 = arith.mulf %194, %195 : vector<16x16xf32>
    %197 = arith.addf %191, %196 : vector<16x16xf32>
    %cst_51 = arith.constant 2.000000e+00 : f32
    %198 = vector.broadcast %cst_51 : f32 to vector<16x16xf32>
    %199 = arith.mulf %198, %197 : vector<16x16xf32>
    %200 = vector.broadcast %186 : vector<16x1xf32> to vector<16x16xf32>
    %201 = arith.subf %200, %199 : vector<16x16xf32>
    %202 = tpu.transpose %186, [1, 0] : vector<16x1xf32> -> vector<1x16xf32>
    %203 = vector.broadcast %202 : vector<1x16xf32> to vector<16x16xf32>
    %204 = arith.addf %201, %203 : vector<16x16xf32>
    %c7_52 = arith.constant 7 : index
    %c0_53 = arith.constant 0 : index
    %c0_54 = arith.constant 0 : index
    %205 = vector.load %arg2[%c7_52, %c0_53, %c0_54] : memref<8x16x16xf32, #tpu.memory_space<vmem>>, vector<1x16x16xf32>
    %206 = vector.shape_cast %205 : vector<1x16x16xf32> to vector<16x16xf32>
    %207 = vector.shape_cast %204 : vector<16x16xf32> to vector<1x16x16xf32>
    tpu.vector_store %arg2[%c7_52, %c0_53, %c0_54], %207 {strides = array<i32>} : memref<8x16x16xf32, #tpu.memory_space<vmem>>, vector<1x16x16xf32>,
    return
  }
  func.func @transform_0(%arg0: i32) -> (i32, i32, i32) {
    %c0_i32 = arith.constant 0 : i32
    %c0_i32_0 = arith.constant 0 : i32
    %c0_i32_1 = arith.constant 0 : i32
    return %arg0, %c0_i32, %c0_i32_0 : i32, i32, i32
  }
  func.func @transform_1(%arg0: i32) -> (i32, i32, i32) {
    %c0_i32 = arith.constant 0 : i32
    %c0_i32_0 = arith.constant 0 : i32
    %c0_i32_1 = arith.constant 0 : i32
    return %arg0, %c0_i32, %c0_i32_0 : i32, i32, i32
  }
}

</mosaic_0001>

<llo_original>
// kernel: tpu_custom_call.1
$region0: #{tpu_custom_call.1}
  #allocation0 [shape = 'u32[]', space=smem, size = 0x4, offset = 0x4, fixed_abs, tag = 'smem constant byte address 0x4 - core index']
  #allocation1 [shape = 'u32[72,128]{1,0:T(1,128)}', space=vmem, size = 0x9000, scoped, tag = 'internal scratch']
  %s0 = inlined_call_operand.vmem [shape: f32[8,16,2], index: 0, kind: input, shape index: {}]
  %s1 = inlined_call_operand.hbm [shape: f32[8,16,16], index: 1, kind: output, shape index: {}]
  %s2 = sld [smem:[#allocation0]]
  $region14: #{tpu_custom_call.1} parent=0
    _
  %s4 = ssub.s32 1, %s2
  %s5 = scalar_select 0, %s4, %s2
  $region1: #{tpu_custom_call.1} parent=0
    #allocation2 [shape = 'u8[65536]{0}', space=vmem, size = 0x10000, scoped, tag = 'output window, operand 0, single buffered']
    #allocation3 [shape = 's32[1]{0}', space=sflag, size = 0x4, scoped, tag = 'scoped memory for tpu_custom_call.1']
    %6 = vsyncpa [#allocation3], 0
    // Predicated region
    $region2: #{tpu_custom_call.1} parent=1 // pred_check
      _
    $region3: #{tpu_custom_call.1} parent=1 // pred_check_branch
      %8 = sbr.rel (0) target = $region5
    $region4: #{tpu_custom_call.1} parent=1 // pred_region
      _
    $region5: #{tpu_custom_call.1} parent=1 // pred_fallthru
      _
    %v9 = vld [vmem:[%s0] sm:$0xff]
    %v10 = vld [vmem:[%s0 + $0x8] sm:$0xff]
    %v11 = vmul.f32 %v9, %v9
    %v12 = vmul.f32 %v10, %v10
    %vm13 = vcmask 15360
    %v14 = vsel %vm13, %v11, 0.0
    %15 = vadd.xlane.f32.xlu0 %v14
    %v16 = vpop.xlane.xlu0 %15
    %v17 = vsel %vm13, %v12, 0.0
    %18 = vadd.xlane.f32.xlu0 %v17
    %v19 = vpop.xlane.xlu0 %18
    %20 = vxpose.xlu0.b32.start [1/16] %v9, 128
    %21 = vxpose.xlu0.b32.cont [2/16] %v10, 128
    %22 = vxpose.xlu0.b32.cont [3/16] 0.0, 128
    %23 = vxpose.xlu0.b32.cont [4/16] 0.0, 128
    %24 = vxpose.xlu0.b32.cont [5/16] 0.0, 128
    %25 = vxpose.xlu0.b32.cont [6/16] 0.0, 128
    %26 = vxpose.xlu0.b32.cont [7/16] 0.0, 128
    %27 = vxpose.xlu0.b32.cont [8/16] 0.0, 128
    %28 = vxpose.xlu0.b32.cont [9/16] 0.0, 128
    %29 = vxpose.xlu0.b32.cont [10/16] 0.0, 128
    %30 = vxpose.xlu0.b32.cont [11/16] 0.0, 128
    %31 = vxpose.xlu0.b32.cont [12/16] 0.0, 128
    %32 = vxpose.xlu0.b32.cont [13/16] 0.0, 128
    %33 = vxpose.xlu0.b32.cont [14/16] 0.0, 128
    %34 = vxpose.xlu0.b32.cont [15/16] 0.0, 128
    %35 = vxpose.xlu0.b32.end [16/16] 0.0, 128
    %v36 = vpop.trf.xlu0
    %v37 = vpop.trf.xlu0
    %v38 = vpop.trf.xlu0
    %v39 = vpop.trf.xlu0
    %v40 = vpop.trf.xlu0
    %v41 = vpop.trf.xlu0
    %v42 = vpop.trf.xlu0
    %v43 = vpop.trf.xlu0
    %v44 = vpop.trf.xlu0
    %v45 = vpop.trf.xlu0
    %v46 = vpop.trf.xlu0
    %v47 = vpop.trf.xlu0
    %v48 = vpop.trf.xlu0
    %v49 = vpop.trf.xlu0
    %v50 = vpop.trf.xlu0
    %v51 = vpop.trf.xlu0
    %53 = vset.pattern.permute.xlu0 0
    %54 = vperm.xlu0 %53, %v9
    %v55 = vpop.permute.xlu0 %54
    %58 = vset.pattern.permute.xlu0 0
    %59 = vperm.xlu0 %58, %v10
    %v60 = vpop.permute.xlu0 %59
    %v62 = vperm.slane %v36, 0
    %v63 = vmul.f32 %v55, %v62
    %v64 = vmul.f32 %v60, %v62
    %65 = vrot.lane.b32.xlu0 %v9, 127
    %v66 = vpop.permute.xlu0 %65
    %67 = vrot.lane.b32.xlu0 %v10, 127
    %v68 = vpop.permute.xlu0 %67
    %71 = vxpose.xlu0.b32.start [1/16] %v66, 128
    %72 = vxpose.xlu0.b32.cont [2/16] %v68, 128
    %73 = vxpose.xlu0.b32.cont [3/16] 0.0, 128
    %74 = vxpose.xlu0.b32.cont [4/16] 0.0, 128
    %75 = vxpose.xlu0.b32.cont [5/16] 0.0, 128
    %76 = vxpose.xlu0.b32.cont [6/16] 0.0, 128
    %77 = vxpose.xlu0.b32.cont [7/16] 0.0, 128
    %78 = vxpose.xlu0.b32.cont [8/16] 0.0, 128
    %79 = vxpose.xlu0.b32.cont [9/16] 0.0, 128
    %80 = vxpose.xlu0.b32.cont [10/16] 0.0, 128
    %81 = vxpose.xlu0.b32.cont [11/16] 0.0, 128
    %82 = vxpose.xlu0.b32.cont [12/16] 0.0, 128
    %83 = vxpose.xlu0.b32.cont [13/16] 0.0, 128
    %84 = vxpose.xlu0.b32.cont [14/16] 0.0, 128
    %85 = vxpose.xlu0.b32.cont [15/16] 0.0, 128
    %86 = vxpose.xlu0.b32.end [16/16] 0.0, 128
    %v87 = vpop.trf.xlu0
    %v88 = vpop.trf.xlu0
    %v89 = vpop.trf.xlu0
    %v90 = vpop.trf.xlu0
    %v91 = vpop.trf.xlu0
    %v92 = vpop.trf.xlu0
    %v93 = vpop.trf.xlu0
    %v94 = vpop.trf.xlu0
    %v95 = vpop.trf.xlu0
    %v96 = vpop.trf.xlu0
    %v97 = vpop.trf.xlu0
    %v98 = vpop.trf.xlu0
    %v99 = vpop.trf.xlu0
    %v100 = vpop.trf.xlu0
    %v101 = vpop.trf.xlu0
    %v102 = vpop.trf.xlu0
    %103 = vset.pattern.permute.xlu0 1
    %104 = vperm.xlu0 %103, %v9
    %v105 = vpop.permute.xlu0 %104
    %107 = vset.pattern.permute.xlu0 1
    %108 = vperm.xlu0 %107, %v10
    %v109 = vpop.permute.xlu0 %108
    %v111 = vperm.slane %v87, 0
    %v112 = vmul.f32 %v105, %v111
    %v113 = vmul.f32 %v109, %v111
    %v114 = vadd.f32 %v63, %v112
    %v115 = vadd.f32 %v64, %v113
    %v116 = vmul.f32 %v114, 2.0
    %v117 = vmul.f32 %v115, 2.0
    %v118 = vsub.f32 %v16, %v116
    %v119 = vsub.f32 %v19, %v117
    %120 = vxpose.xlu0.b32.start [1/16] %v16, 128
    %121 = vxpose.xlu0.b32.cont [2/16] %v19, 128
    %122 = vxpose.xlu0.b32.cont [3/16] 0.0, 128
    %123 = vxpose.xlu0.b32.cont [4/16] 0.0, 128
    %124 = vxpose.xlu0.b32.cont [5/16] 0.0, 128
    %125 = vxpose.xlu0.b32.cont [6/16] 0.0, 128
    %126 = vxpose.xlu0.b32.cont [7/16] 0.0, 128
    %127 = vxpose.xlu0.b32.cont [8/16] 0.0, 128
    %128 = vxpose.xlu0.b32.cont [9/16] 0.0, 128
    %129 = vxpose.xlu0.b32.cont [10/16] 0.0, 128
    %130 = vxpose.xlu0.b32.cont [11/16] 0.0, 128
    %131 = vxpose.xlu0.b32.cont [12/16] 0.0, 128
    %132 = vxpose.xlu0.b32.cont [13/16] 0.0, 128
    %133 = vxpose.xlu0.b32.cont [14/16] 0.0, 128
    %134 = vxpose.xlu0.b32.cont [15/16] 0.0, 128
    %135 = vxpose.xlu0.b32.end [16/16] 0.0, 128
    %v136 = vpop.trf.xlu0
    %v137 = vpop.trf.xlu0
    %v138 = vpop.trf.xlu0
    %v139 = vpop.trf.xlu0
    %v140 = vpop.trf.xlu0
    %v141 = vpop.trf.xlu0
    %v142 = vpop.trf.xlu0
    %v143 = vpop.trf.xlu0
    %v144 = vpop.trf.xlu0
    %v145 = vpop.trf.xlu0
    %v146 = vpop.trf.xlu0
    %v147 = vpop.trf.xlu0
    %v148 = vpop.trf.xlu0
    %v149 = vpop.trf.xlu0
    %v150 = vpop.trf.xlu0
    %v151 = vpop.trf.xlu0
    %v152 = vperm.slane %v136, 0
    %v153 = vadd.f32 %v118, %v152
    %v154 = vadd.f32 %v119, %v152
    %vm155 = vcmask 130048
    %156 = vst.msk [vmem:[#allocation2] sm:$0xff] %vm155, %v153
    %157 = vst.msk [vmem:[#allocation2 + $0x8] sm:$0xff] %vm155, %v154
    %s158 = scalar_lea.vmem %s0, 16
    %v159 = vld [vmem:[%s158] sm:$0xff]
    %v160 = vld [vmem:[%s158 + $0x8] sm:$0xff]
    %v161 = vmul.f32 %v159, %v159
    %v162 = vmul.f32 %v160, %v160
    %v163 = vsel %vm13, %v161, 0.0
    %164 = vadd.xlane.f32.xlu0 %v163
    %v165 = vpop.xlane.xlu0 %164
    %v166 = vsel %vm13, %v162, 0.0
    %167 = vadd.xlane.f32.xlu0 %v166
    %v168 = vpop.xlane.xlu0 %167
    %169 = vxpose.xlu0.b32.start [1/16] %v159, 128
    %170 = vxpose.xlu0.b32.cont [2/16] %v160, 128
    %171 = vxpose.xlu0.b32.cont [3/16] 0.0, 128
    %172 = vxpose.xlu0.b32.cont [4/16] 0.0, 128
    %173 = vxpose.xlu0.b32.cont [5/16] 0.0, 128
    %174 = vxpose.xlu0.b32.cont [6/16] 0.0, 128
    %175 = vxpose.xlu0.b32.cont [7/16] 0.0, 128
    %176 = vxpose.xlu0.b32.cont [8/16] 0.0, 128
    %177 = vxpose.xlu0.b32.cont [9/16] 0.0, 128
    %178 = vxpose.xlu0.b32.cont [10/16] 0.0, 128
    %179 = vxpose.xlu0.b32.cont [11/16] 0.0, 128
    %180 = vxpose.xlu0.b32.cont [12/16] 0.0, 128
    %181 = vxpose.xlu0.b32.cont [13/16] 0.0, 128
    %182 = vxpose.xlu0.b32.cont [14/16] 0.0, 128
    %183 = vxpose.xlu0.b32.cont [15/16] 0.0, 128
    %184 = vxpose.xlu0.b32.end [16/16] 0.0, 128
    %v185 = vpop.trf.xlu0
    %v186 = vpop.trf.xlu0
    %v187 = vpop.trf.xlu0
    %v188 = vpop.trf.xlu0
    %v189 = vpop.trf.xlu0
    %v190 = vpop.trf.xlu0
    %v191 = vpop.trf.xlu0
    %v192 = vpop.trf.xlu0
    %v193 = vpop.trf.xlu0
    %v194 = vpop.trf.xlu0
    %v195 = vpop.trf.xlu0
    %v196 = vpop.trf.xlu0
    %v197 = vpop.trf.xlu0
    %v198 = vpop.trf.xlu0
    %v199 = vpop.trf.xlu0
    %v200 = vpop.trf.xlu0
    %202 = vset.pattern.permute.xlu0 0
    %203 = vperm.xlu0 %202, %v159
    %v204 = vpop.permute.xlu0 %203
    %207 = vset.pattern.permute.xlu0 0
    %208 = vperm.xlu0 %207, %v160
    %v209 = vpop.permute.xlu0 %208
    %v211 = vperm.slane %v185, 0
    %v212 = vmul.f32 %v204, %v211
    %v213 = vmul.f32 %v209, %v211
    %214 = vrot.lane.b32.xlu0 %v159, 127
    %v215 = vpop.permute.xlu0 %214
    %216 = vrot.lane.b32.xlu0 %v160, 127
    %v217 = vpop.permute.xlu0 %216
    %220 = vxpose.xlu0.b32.start [1/16] %v215, 128
    %221 = vxpose.xlu0.b32.cont [2/16] %v217, 128
    %222 = vxpose.xlu0.b32.cont [3/16] 0.0, 128
    %223 = vxpose.xlu0.b32.cont [4/16] 0.0, 128
    %224 = vxpose.xlu0.b32.cont [5/16] 0.0, 128
    %225 = vxpose.xlu0.b32.cont [6/16] 0.0, 128
    %226 = vxpose.xlu0.b32.cont [7/16] 0.0, 128
    %227 = vxpose.xlu0.b32.cont [8/16] 0.0, 128
    %228 = vxpose.xlu0.b32.cont [9/16] 0.0, 128
    %229 = vxpose.xlu0.b32.cont [10/16] 0.0, 128
    %230 = vxpose.xlu0.b32.cont [11/16] 0.0, 128
    %231 = vxpose.xlu0.b32.cont [12/16] 0.0, 128
    %232 = vxpose.xlu0.b32.cont [13/16] 0.0, 128
    %233 = vxpose.xlu0.b32.cont [14/16] 0.0, 128
    %234 = vxpose.xlu0.b32.cont [15/16] 0.0, 128
    %235 = vxpose.xlu0.b32.end [16/16] 0.0, 128
    %v236 = vpop.trf.xlu0
    %v237 = vpop.trf.xlu0
    %v238 = vpop.trf.xlu0
    %v239 = vpop.trf.xlu0
    %v240 = vpop.trf.xlu0
    %v241 = vpop.trf.xlu0
    %v242 = vpop.trf.xlu0
    %v243 = vpop.trf.xlu0
    %v244 = vpop.trf.xlu0
    %v245 = vpop.trf.xlu0
    %v246 = vpop.trf.xlu0
    %v247 = vpop.trf.xlu0
    %v248 = vpop.trf.xlu0
    %v249 = vpop.trf.xlu0
    %v250 = vpop.trf.xlu0
    %v251 = vpop.trf.xlu0
    %252 = vset.pattern.permute.xlu0 1
    %253 = vperm.xlu0 %252, %v159
    %v254 = vpop.permute.xlu0 %253
    %256 = vset.pattern.permute.xlu0 1
    %257 = vperm.xlu0 %256, %v160
    %v258 = vpop.permute.xlu0 %257
    %v260 = vperm.slane %v236, 0
    %v261 = vmul.f32 %v254, %v260
    %v262 = vmul.f32 %v258, %v260
    %v263 = vadd.f32 %v212, %v261
    %v264 = vadd.f32 %v213, %v262
    %v265 = vmul.f32 %v263, 2.0
    %v266 = vmul.f32 %v264, 2.0
    %v267 = vsub.f32 %v165, %v265
    %v268 = vsub.f32 %v168, %v266
    %269 = vxpose.xlu0.b32.start [1/16] %v165, 128
    %270 = vxpose.xlu0.b32.cont [2/16] %v168, 128
    %271 = vxpose.xlu0.b32.cont [3/16] 0.0, 128
    %272 = vxpose.xlu0.b32.cont [4/16] 0.0, 128
    %273 = vxpose.xlu0.b32.cont [5/16] 0.0, 128
    %274 = vxpose.xlu0.b32.cont [6/16] 0.0, 128
    %275 = vxpose.xlu0.b32.cont [7/16] 0.0, 128
    %276 = vxpose.xlu0.b32.cont [8/16] 0.0, 128
    %277 = vxpose.xlu0.b32.cont [9/16] 0.0, 128
    %278 = vxpose.xlu0.b32.cont [10/16] 0.0, 128
    %279 = vxpose.xlu0.b32.cont [11/16] 0.0, 128
    %280 = vxpose.xlu0.b32.cont [12/16] 0.0, 128
    %281 = vxpose.xlu0.b32.cont [13/16] 0.0, 128
    %282 = vxpose.xlu0.b32.cont [14/16] 0.0, 128
    %283 = vxpose.xlu0.b32.cont [15/16] 0.0, 128
    %284 = vxpose.xlu0.b32.end [16/16] 0.0, 128
    %v285 = vpop.trf.xlu0
    %v286 = vpop.trf.xlu0
    %v287 = vpop.trf.xlu0
    %v288 = vpop.trf.xlu0
    %v289 = vpop.trf.xlu0
    %v290 = vpop.trf.xlu0
    %v291 = vpop.trf.xlu0
    %v292 = vpop.trf.xlu0
    %v293 = vpop.trf.xlu0
    %v294 = vpop.trf.xlu0
    %v295 = vpop.trf.xlu0
    %v296 = vpop.trf.xlu0
    %v297 = vpop.trf.xlu0
    %v298 = vpop.trf.xlu0
    %v299 = vpop.trf.xlu0
    %v300 = vpop.trf.xlu0
    %v301 = vperm.slane %v285, 0
    %v302 = vadd.f32 %v267, %v301
    %v303 = vadd.f32 %v268, %v301
    %s304 = scalar_lea.vmem [#allocation2], 16
    %305 = vst.msk [vmem:[%s304] sm:$0xff] %vm155, %v302
    %306 = vst.msk [vmem:[%s304 + $0x8] sm:$0xff] %vm155, %v303
    %s307 = scalar_lea.vmem %s0, 32
    %v308 = vld [vmem:[%s307] sm:$0xff]
    %v309 = vld [vmem:[%s307 + $0x8] sm:$0xff]
    %v310 = vmul.f32 %v308, %v308
    %v311 = vmul.f32 %v309, %v309
    %v312 = vsel %vm13, %v310, 0.0
    %313 = vadd.xlane.f32.xlu0 %v312
    %v314 = vpop.xlane.xlu0 %313
    %v315 = vsel %vm13, %v311, 0.0
    %316 = vadd.xlane.f32.xlu0 %v315
    %v317 = vpop.xlane.xlu0 %316
    %318 = vxpose.xlu0.b32.start [1/16] %v308, 128
    %319 = vxpose.xlu0.b32.cont [2/16] %v309, 128
    %320 = vxpose.xlu0.b32.cont [3/16] 0.0, 128
    %321 = vxpose.xlu0.b32.cont [4/16] 0.0, 128
    %322 = vxpose.xlu0.b32.cont [5/16] 0.0, 128
    %323 = vxpose.xlu0.b32.cont [6/16] 0.0, 128
    %324 = vxpose.xlu0.b32.cont [7/16] 0.0, 128
    %325 = vxpose.xlu0.b32.cont [8/16] 0.0, 128
    %326 = vxpose.xlu0.b32.cont [9/16] 0.0, 128
    %327 = vxpose.xlu0.b32.cont [10/16] 0.0, 128
    %328 = vxpose.xlu0.b32.cont [11/16] 0.0, 128
    %329 = vxpose.xlu0.b32.cont [12/16] 0.0, 128
    %330 = vxpose.xlu0.b32.cont [13/16] 0.0, 128
    %331 = vxpose.xlu0.b32.cont [14/16] 0.0, 128
    %332 = vxpose.xlu0.b32.cont [15/16] 0.0, 128
    %333 = vxpose.xlu0.b32.end [16/16] 0.0, 128
    %v334 = vpop.trf.xlu0
    %v335 = vpop.trf.xlu0
    %v336 = vpop.trf.xlu0
    %v337 = vpop.trf.xlu0
    %v338 = vpop.trf.xlu0
    %v339 = vpop.trf.xlu0
    %v340 = vpop.trf.xlu0
    %v341 = vpop.trf.xlu0
    %v342 = vpop.trf.xlu0
    %v343 = vpop.trf.xlu0
    %v344 = vpop.trf.xlu0
    %v345 = vpop.trf.xlu0
    %v346 = vpop.trf.xlu0
    %v347 = vpop.trf.xlu0
    %v348 = vpop.trf.xlu0
    %v349 = vpop.trf.xlu0
    %351 = vset.pattern.permute.xlu0 0
    %352 = vperm.xlu0 %351, %v308
    %v353 = vpop.permute.xlu0 %352
    %356 = vset.pattern.permute.xlu0 0
    %357 = vperm.xlu0 %356, %v309
    %v358 = vpop.permute.xlu0 %357
    %v360 = vperm.slane %v334, 0
    %v361 = vmul.f32 %v353, %v360
    %v362 = vmul.f32 %v358, %v360
    %363 = vrot.lane.b32.xlu0 %v308, 127
    %v364 = vpop.permute.xlu0 %363
    %365 = vrot.lane.b32.xlu0 %v309, 127
    %v366 = vpop.permute.xlu0 %365
    %369 = vxpose.xlu0.b32.start [1/16] %v364, 128
    %370 = vxpose.xlu0.b32.cont [2/16] %v366, 128
    %371 = vxpose.xlu0.b32.cont [3/16] 0.0, 128
    %372 = vxpose.xlu0.b32.cont [4/16] 0.0, 128
    %373 = vxpose.xlu0.b32.cont [5/16] 0.0, 128
    %374 = vxpose.xlu0.b32.cont [6/16] 0.0, 128
    %375 = vxpose.xlu0.b32.cont [7/16] 0.0, 128
    %376 = vxpose.xlu0.b32.cont [8/16] 0.0, 128
    %377 = vxpose.xlu0.b32.cont [9/16] 0.0, 128
    %378 = vxpose.xlu0.b32.cont [10/16] 0.0, 128
    %379 = vxpose.xlu0.b32.cont [11/16] 0.0, 128
    %380 = vxpose.xlu0.b32.cont [12/16] 0.0, 128
    %381 = vxpose.xlu0.b32.cont [13/16] 0.0, 128
    %382 = vxpose.xlu0.b32.cont [14/16] 0.0, 128
    %383 = vxpose.xlu0.b32.cont [15/16] 0.0, 128
    %384 = vxpose.xlu0.b32.end [16/16] 0.0, 128
    %v385 = vpop.trf.xlu0
    %v386 = vpop.trf.xlu0
    %v387 = vpop.trf.xlu0
    %v388 = vpop.trf.xlu0
    %v389 = vpop.trf.xlu0
    %v390 = vpop.trf.xlu0
    %v391 = vpop.trf.xlu0
    %v392 = vpop.trf.xlu0
    %v393 = vpop.trf.xlu0
    %v394 = vpop.trf.xlu0
    %v395 = vpop.trf.xlu0
    %v396 = vpop.trf.xlu0
    %v397 = vpop.trf.xlu0
    %v398 = vpop.trf.xlu0
    %v399 = vpop.trf.xlu0
    %v400 = vpop.trf.xlu0
    %401 = vset.pattern.permute.xlu0 1
    %402 = vperm.xlu0 %401, %v308
    %v403 = vpop.permute.xlu0 %402
    %405 = vset.pattern.permute.xlu0 1
    %406 = vperm.xlu0 %405, %v309
    %v407 = vpop.permute.xlu0 %406
    %v409 = vperm.slane %v385, 0
    %v410 = vmul.f32 %v403, %v409
    %v411 = vmul.f32 %v407, %v409
    %v412 = vadd.f32 %v361, %v410
    %v413 = vadd.f32 %v362, %v411
    %v414 = vmul.f32 %v412, 2.0
    %v415 = vmul.f32 %v413, 2.0
    %v416 = vsub.f32 %v314, %v414
    %v417 = vsub.f32 %v317, %v415
    %418 = vxpose.xlu0.b32.start [1/16] %v314, 128
    %419 = vxpose.xlu0.b32.cont [2/16] %v317, 128
    %420 = vxpose.xlu0.b32.cont [3/16] 0.0, 128
    %421 = vxpose.xlu0.b32.cont [4/16] 0.0, 128
    %422 = vxpose.xlu0.b32.cont [5/16] 0.0, 128
    %423 = vxpose.xlu0.b32.cont [6/16] 0.0, 128
    %424 = vxpose.xlu0.b32.cont [7/16] 0.0, 128
    %425 = vxpose.xlu0.b32.cont [8/16] 0.0, 128
    %426 = vxpose.xlu0.b32.cont [9/16] 0.0, 128
    %427 = vxpose.xlu0.b32.cont [10/16] 0.0, 128
    %428 = vxpose.xlu0.b32.cont [11/16] 0.0, 128
    %429 = vxpose.xlu0.b32.cont [12/16] 0.0, 128
    %430 = vxpose.xlu0.b32.cont [13/16] 0.0, 128
    %431 = vxpose.xlu0.b32.cont [14/16] 0.0, 128
    %432 = vxpose.xlu0.b32.cont [15/16] 0.0, 128
    %433 = vxpose.xlu0.b32.end [16/16] 0.0, 128
    %v434 = vpop.trf.xlu0
    %v435 = vpop.trf.xlu0
    %v436 = vpop.trf.xlu0
    %v437 = vpop.trf.xlu0
    %v438 = vpop.trf.xlu0
    %v439 = vpop.trf.xlu0
    %v440 = vpop.trf.xlu0
    %v441 = vpop.trf.xlu0
    %v442 = vpop.trf.xlu0
    %v443 = vpop.trf.xlu0
    %v444 = vpop.trf.xlu0
    %v445 = vpop.trf.xlu0
    %v446 = vpop.trf.xlu0
    %v447 = vpop.trf.xlu0
    %v448 = vpop.trf.xlu0
    %v449 = vpop.trf.xlu0
    %v450 = vperm.slane %v434, 0
    %v451 = vadd.f32 %v416, %v450
    %v452 = vadd.f32 %v417, %v450
    %s453 = scalar_lea.vmem [#allocation2], 32
    %454 = vst.msk [vmem:[%s453] sm:$0xff] %vm155, %v451
    %455 = vst.msk [vmem:[%s453 + $0x8] sm:$0xff] %vm155, %v452
    %s456 = scalar_lea.vmem %s0, 48
    %v457 = vld [vmem:[%s456] sm:$0xff]
    %v458 = vld [vmem:[%s456 + $0x8] sm:$0xff]
    %v459 = vmul.f32 %v457, %v457
    %v460 = vmul.f32 %v458, %v458
    %v461 = vsel %vm13, %v459, 0.0
    %462 = vadd.xlane.f32.xlu0 %v461
    %v463 = vpop.xlane.xlu0 %462
    %v464 = vsel %vm13, %v460, 0.0
    %465 = vadd.xlane.f32.xlu0 %v464
    %v466 = vpop.xlane.xlu0 %465
    %467 = vxpose.xlu0.b32.start [1/16] %v457, 128
    %468 = vxpose.xlu0.b32.cont [2/16] %v458, 128
    %469 = vxpose.xlu0.b32.cont [3/16] 0.0, 128
    %470 = vxpose.xlu0.b32.cont [4/16] 0.0, 128
    %471 = vxpose.xlu0.b32.cont [5/16] 0.0, 128
    %472 = vxpose.xlu0.b32.cont [6/16] 0.0, 128
    %473 = vxpose.xlu0.b32.cont [7/16] 0.0, 128
    %474 = vxpose.xlu0.b32.cont [8/16] 0.0, 128
    %475 = vxpose.xlu0.b32.cont [9/16] 0.0, 128
    %476 = vxpose.xlu0.b32.cont [10/16] 0.0, 128
    %477 = vxpose.xlu0.b32.cont [11/16] 0.0, 128
    %478 = vxpose.xlu0.b32.cont [12/16] 0.0, 128
    %479 = vxpose.xlu0.b32.cont [13/16] 0.0, 128
    %480 = vxpose.xlu0.b32.cont [14/16] 0.0, 128
    %481 = vxpose.xlu0.b32.cont [15/16] 0.0, 128
    %482 = vxpose.xlu0.b32.end [16/16] 0.0, 128
    %v483 = vpop.trf.xlu0
    %v484 = vpop.trf.xlu0
    %v485 = vpop.trf.xlu0
    %v486 = vpop.trf.xlu0
    %v487 = vpop.trf.xlu0
    %v488 = vpop.trf.xlu0
    %v489 = vpop.trf.xlu0
    %v490 = vpop.trf.xlu0
    %v491 = vpop.trf.xlu0
    %v492 = vpop.trf.xlu0
    %v493 = vpop.trf.xlu0
    %v494 = vpop.trf.xlu0
    %v495 = vpop.trf.xlu0
    %v496 = vpop.trf.xlu0
    %v497 = vpop.trf.xlu0
    %v498 = vpop.trf.xlu0
    %500 = vset.pattern.permute.xlu0 0
    %501 = vperm.xlu0 %500, %v457
    %v502 = vpop.permute.xlu0 %501
    %505 = vset.pattern.permute.xlu0 0
    %506 = vperm.xlu0 %505, %v458
    %v507 = vpop.permute.xlu0 %506
    %v509 = vperm.slane %v483, 0
    %v510 = vmul.f32 %v502, %v509
    %v511 = vmul.f32 %v507, %v509
    %512 = vrot.lane.b32.xlu0 %v457, 127
    %v513 = vpop.permute.xlu0 %512
    %514 = vrot.lane.b32.xlu0 %v458, 127
    %v515 = vpop.permute.xlu0 %514
    %518 = vxpose.xlu0.b32.start [1/16] %v513, 128
    %519 = vxpose.xlu0.b32.cont [2/16] %v515, 128
    %520 = vxpose.xlu0.b32.cont [3/16] 0.0, 128
    %521 = vxpose.xlu0.b32.cont [4/16] 0.0, 128
    %522 = vxpose.xlu0.b32.cont [5/16] 0.0, 128
    %523 = vxpose.xlu0.b32.cont [6/16] 0.0, 128
    %524 = vxpose.xlu0.b32.cont [7/16] 0.0, 128
    %525 = vxpose.xlu0.b32.cont [8/16] 0.0, 128
    %526 = vxpose.xlu0.b32.cont [9/16] 0.0, 128
    %527 = vxpose.xlu0.b32.cont [10/16] 0.0, 128
    %528 = vxpose.xlu0.b32.cont [11/16] 0.0, 128
    %529 = vxpose.xlu0.b32.cont [12/16] 0.0, 128
    %530 = vxpose.xlu0.b32.cont [13/16] 0.0, 128
    %531 = vxpose.xlu0.b32.cont [14/16] 0.0, 128
    %532 = vxpose.xlu0.b32.cont [15/16] 0.0, 128
    %533 = vxpose.xlu0.b32.end [16/16] 0.0, 128
    %v534 = vpop.trf.xlu0
    %v535 = vpop.trf.xlu0
    %v536 = vpop.trf.xlu0
    %v537 = vpop.trf.xlu0
    %v538 = vpop.trf.xlu0
    %v539 = vpop.trf.xlu0
    %v540 = vpop.trf.xlu0
    %v541 = vpop.trf.xlu0
    %v542 = vpop.trf.xlu0
    %v543 = vpop.trf.xlu0
    %v544 = vpop.trf.xlu0
    %v545 = vpop.trf.xlu0
    %v546 = vpop.trf.xlu0
    %v547 = vpop.trf.xlu0
    %v548 = vpop.trf.xlu0
    %v549 = vpop.trf.xlu0
    %550 = vset.pattern.permute.xlu0 1
    %551 = vperm.xlu0 %550, %v457
    %v552 = vpop.permute.xlu0 %551
    %554 = vset.pattern.permute.xlu0 1
    %555 = vperm.xlu0 %554, %v458
    %v556 = vpop.permute.xlu0 %555
    %v558 = vperm.slane %v534, 0
    %v559 = vmul.f32 %v552, %v558
    %v560 = vmul.f32 %v556, %v558
    %v561 = vadd.f32 %v510, %v559
    %v562 = vadd.f32 %v511, %v560
    %v563 = vmul.f32 %v561, 2.0
    %v564 = vmul.f32 %v562, 2.0
    %v565 = vsub.f32 %v463, %v563
    %v566 = vsub.f32 %v466, %v564
    %567 = vxpose.xlu0.b32.start [1/16] %v463, 128
    %568 = vxpose.xlu0.b32.cont [2/16] %v466, 128
    %569 = vxpose.xlu0.b32.cont [3/16] 0.0, 128
    %570 = vxpose.xlu0.b32.cont [4/16] 0.0, 128
    %571 = vxpose.xlu0.b32.cont [5/16] 0.0, 128
    %572 = vxpose.xlu0.b32.cont [6/16] 0.0, 128
    %573 = vxpose.xlu0.b32.cont [7/16] 0.0, 128
    %574 = vxpose.xlu0.b32.cont [8/16] 0.0, 128
    %575 = vxpose.xlu0.b32.cont [9/16] 0.0, 128
    %576 = vxpose.xlu0.b32.cont [10/16] 0.0, 128
    %577 = vxpose.xlu0.b32.cont [11/16] 0.0, 128
    %578 = vxpose.xlu0.b32.cont [12/16] 0.0, 128
    %579 = vxpose.xlu0.b32.cont [13/16] 0.0, 128
    %580 = vxpose.xlu0.b32.cont [14/16] 0.0, 128
    %581 = vxpose.xlu0.b32.cont [15/16] 0.0, 128
    %582 = vxpose.xlu0.b32.end [16/16] 0.0, 128
    %v583 = vpop.trf.xlu0
    %v584 = vpop.trf.xlu0
    %v585 = vpop.trf.xlu0
    %v586 = vpop.trf.xlu0
    %v587 = vpop.trf.xlu0
    %v588 = vpop.trf.xlu0
    %v589 = vpop.trf.xlu0
    %v590 = vpop.trf.xlu0
    %v591 = vpop.trf.xlu0
    %v592 = vpop.trf.xlu0
    %v593 = vpop.trf.xlu0
    %v594 = vpop.trf.xlu0
    %v595 = vpop.trf.xlu0
    %v596 = vpop.trf.xlu0
    %v597 = vpop.trf.xlu0
    %v598 = vpop.trf.xlu0
    %v599 = vperm.slane %v583, 0
    %v600 = vadd.f32 %v565, %v599
    %v601 = vadd.f32 %v566, %v599
    %s602 = scalar_lea.vmem [#allocation2], 48
    %603 = vst.msk [vmem:[%s602] sm:$0xff] %vm155, %v600
    %604 = vst.msk [vmem:[%s602 + $0x8] sm:$0xff] %vm155, %v601
    %s605 = scalar_lea.vmem %s0, 64
    %v606 = vld [vmem:[%s605] sm:$0xff]
    %v607 = vld [vmem:[%s605 + $0x8] sm:$0xff]
    %v608 = vmul.f32 %v606, %v606
    %v609 = vmul.f32 %v607, %v607
    %v610 = vsel %vm13, %v608, 0.0
    %611 = vadd.xlane.f32.xlu0 %v610
    %v612 = vpop.xlane.xlu0 %611
    %v613 = vsel %vm13, %v609, 0.0
    %614 = vadd.xlane.f32.xlu0 %v613
    %v615 = vpop.xlane.xlu0 %614
    %616 = vxpose.xlu0.b32.start [1/16] %v606, 128
    %617 = vxpose.xlu0.b32.cont [2/16] %v607, 128
    %618 = vxpose.xlu0.b32.cont [3/16] 0.0, 128
    %619 = vxpose.xlu0.b32.cont [4/16] 0.0, 128
    %620 = vxpose.xlu0.b32.cont [5/16] 0.0, 128
    %621 = vxpose.xlu0.b32.cont [6/16] 0.0, 128
    %622 = vxpose.xlu0.b32.cont [7/16] 0.0, 128
    %623 = vxpose.xlu0.b32.cont [8/16] 0.0, 128
    %624 = vxpose.xlu0.b32.cont [9/16] 0.0, 128
    %625 = vxpose.xlu0.b32.cont [10/16] 0.0, 128
    %626 = vxpose.xlu0.b32.cont [11/16] 0.0, 128
    %627 = vxpose.xlu0.b32.cont [12/16] 0.0, 128
    %628 = vxpose.xlu0.b32.cont [13/16] 0.0, 128
    %629 = vxpose.xlu0.b32.cont [14/16] 0.0, 128
    %630 = vxpose.xlu0.b32.cont [15/16] 0.0, 128
    %631 = vxpose.xlu0.b32.end [16/16] 0.0, 128
    %v632 = vpop.trf.xlu0
    %v633 = vpop.trf.xlu0
    %v634 = vpop.trf.xlu0
    %v635 = vpop.trf.xlu0
    %v636 = vpop.trf.xlu0
    %v637 = vpop.trf.xlu0
    %v638 = vpop.trf.xlu0
    %v639 = vpop.trf.xlu0
    %v640 = vpop.trf.xlu0
    %v641 = vpop.trf.xlu0
    %v642 = vpop.trf.xlu0
    %v643 = vpop.trf.xlu0
    %v644 = vpop.trf.xlu0
    %v645 = vpop.trf.xlu0
    %v646 = vpop.trf.xlu0
    %v647 = vpop.trf.xlu0
    %649 = vset.pattern.permute.xlu0 0
    %650 = vperm.xlu0 %649, %v606
    %v651 = vpop.permute.xlu0 %650
    %654 = vset.pattern.permute.xlu0 0
    %655 = vperm.xlu0 %654, %v607
    %v656 = vpop.permute.xlu0 %655
    %v658 = vperm.slane %v632, 0
    %v659 = vmul.f32 %v651, %v658
    %v660 = vmul.f32 %v656, %v658
    %661 = vrot.lane.b32.xlu0 %v606, 127
    %v662 = vpop.permute.xlu0 %661
    %663 = vrot.lane.b32.xlu0 %v607, 127
    %v664 = vpop.permute.xlu0 %663
    %667 = vxpose.xlu0.b32.start [1/16] %v662, 128
    %668 = vxpose.xlu0.b32.cont [2/16] %v664, 128
    %669 = vxpose.xlu0.b32.cont [3/16] 0.0, 128
    %670 = vxpose.xlu0.b32.cont [4/16] 0.0, 128
    %671 = vxpose.xlu0.b32.cont [5/16] 0.0, 128
    %672 = vxpose.xlu0.b32.cont [6/16] 0.0, 128
    %673 = vxpose.xlu0.b32.cont [7/16] 0.0, 128
    %674 = vxpose.xlu0.b32.cont [8/16] 0.0, 128
    %675 = vxpose.xlu0.b32.cont [9/16] 0.0, 128
    %676 = vxpose.xlu0.b32.cont [10/16] 0.0, 128
    %677 = vxpose.xlu0.b32.cont [11/16] 0.0, 128
    %678 = vxpose.xlu0.b32.cont [12/16] 0.0, 128
    %679 = vxpose.xlu0.b32.cont [13/16] 0.0, 128
    %680 = vxpose.xlu0.b32.cont [14/16] 0.0, 128
    %681 = vxpose.xlu0.b32.cont [15/16] 0.0, 128
    %682 = vxpose.xlu0.b32.end [16/16] 0.0, 128
    %v683 = vpop.trf.xlu0
    %v684 = vpop.trf.xlu0
    %v685 = vpop.trf.xlu0
    %v686 = vpop.trf.xlu0
    %v687 = vpop.trf.xlu0
    %v688 = vpop.trf.xlu0
    %v689 = vpop.trf.xlu0
    %v690 = vpop.trf.xlu0
    %v691 = vpop.trf.xlu0
    %v692 = vpop.trf.xlu0
    %v693 = vpop.trf.xlu0
    %v694 = vpop.trf.xlu0
    %v695 = vpop.trf.xlu0
    %v696 = vpop.trf.xlu0
    %v697 = vpop.trf.xlu0
    %v698 = vpop.trf.xlu0
    %699 = vset.pattern.permute.xlu0 1
    %700 = vperm.xlu0 %699, %v606
    %v701 = vpop.permute.xlu0 %700
    %703 = vset.pattern.permute.xlu0 1
    %704 = vperm.xlu0 %703, %v607
    %v705 = vpop.permute.xlu0 %704
    %v707 = vperm.slane %v683, 0
    %v708 = vmul.f32 %v701, %v707
    %v709 = vmul.f32 %v705, %v707
    %v710 = vadd.f32 %v659, %v708
    %v711 = vadd.f32 %v660, %v709
    %v712 = vmul.f32 %v710, 2.0
    %v713 = vmul.f32 %v711, 2.0
    %v714 = vsub.f32 %v612, %v712
    %v715 = vsub.f32 %v615, %v713
    %716 = vxpose.xlu0.b32.start [1/16] %v612, 128
    %717 = vxpose.xlu0.b32.cont [2/16] %v615, 128
    %718 = vxpose.xlu0.b32.cont [3/16] 0.0, 128
    %719 = vxpose.xlu0.b32.cont [4/16] 0.0, 128
    %720 = vxpose.xlu0.b32.cont [5/16] 0.0, 128
    %721 = vxpose.xlu0.b32.cont [6/16] 0.0, 128
    %722 = vxpose.xlu0.b32.cont [7/16] 0.0, 128
    %723 = vxpose.xlu0.b32.cont [8/16] 0.0, 128
    %724 = vxpose.xlu0.b32.cont [9/16] 0.0, 128
    %725 = vxpose.xlu0.b32.cont [10/16] 0.0, 128
    %726 = vxpose.xlu0.b32.cont [11/16] 0.0, 128
    %727 = vxpose.xlu0.b32.cont [12/16] 0.0, 128
    %728 = vxpose.xlu0.b32.cont [13/16] 0.0, 128
    %729 = vxpose.xlu0.b32.cont [14/16] 0.0, 128
    %730 = vxpose.xlu0.b32.cont [15/16] 0.0, 128
    %731 = vxpose.xlu0.b32.end [16/16] 0.0, 128
    %v732 = vpop.trf.xlu0
    %v733 = vpop.trf.xlu0
    %v734 = vpop.trf.xlu0
    %v735 = vpop.trf.xlu0
    %v736 = vpop.trf.xlu0
    %v737 = vpop.trf.xlu0
    %v738 = vpop.trf.xlu0
    %v739 = vpop.trf.xlu0
    %v740 = vpop.trf.xlu0
    %v741 = vpop.trf.xlu0
    %v742 = vpop.trf.xlu0
    %v743 = vpop.trf.xlu0
    %v744 = vpop.trf.xlu0
    %v745 = vpop.trf.xlu0
    %v746 = vpop.trf.xlu0
    %v747 = vpop.trf.xlu0
    %v748 = vperm.slane %v732, 0
    %v749 = vadd.f32 %v714, %v748
    %v750 = vadd.f32 %v715, %v748
    %s751 = scalar_lea.vmem [#allocation2], 64
    %752 = vst.msk [vmem:[%s751] sm:$0xff] %vm155, %v749
    %753 = vst.msk [vmem:[%s751 + $0x8] sm:$0xff] %vm155, %v750
    %s754 = scalar_lea.vmem %s0, 80
    %v755 = vld [vmem:[%s754] sm:$0xff]
    %v756 = vld [vmem:[%s754 + $0x8] sm:$0xff]
    %v757 = vmul.f32 %v755, %v755
    %v758 = vmul.f32 %v756, %v756
    %v759 = vsel %vm13, %v757, 0.0
    %760 = vadd.xlane.f32.xlu0 %v759
    %v761 = vpop.xlane.xlu0 %760
    %v762 = vsel %vm13, %v758, 0.0
    %763 = vadd.xlane.f32.xlu0 %v762
    %v764 = vpop.xlane.xlu0 %763
    %765 = vxpose.xlu0.b32.start [1/16] %v755, 128
    %766 = vxpose.xlu0.b32.cont [2/16] %v756, 128
    %767 = vxpose.xlu0.b32.cont [3/16] 0.0, 128
    %768 = vxpose.xlu0.b32.cont [4/16] 0.0, 128
    %769 = vxpose.xlu0.b32.cont [5/16] 0.0, 128
    %770 = vxpose.xlu0.b32.cont [6/16] 0.0, 128
    %771 = vxpose.xlu0.b32.cont [7/16] 0.0, 128
    %772 = vxpose.xlu0.b32.cont [8/16] 0.0, 128
    %773 = vxpose.xlu0.b32.cont [9/16] 0.0, 128
    %774 = vxpose.xlu0.b32.cont [10/16] 0.0, 128
    %775 = vxpose.xlu0.b32.cont [11/16] 0.0, 128
    %776 = vxpose.xlu0.b32.cont [12/16] 0.0, 128
    %777 = vxpose.xlu0.b32.cont [13/16] 0.0, 128
    %778 = vxpose.xlu0.b32.cont [14/16] 0.0, 128
    %779 = vxpose.xlu0.b32.cont [15/16] 0.0, 128
    %780 = vxpose.xlu0.b32.end [16/16] 0.0, 128
    %v781 = vpop.trf.xlu0
    %v782 = vpop.trf.xlu0
    %v783 = vpop.trf.xlu0
    %v784 = vpop.trf.xlu0
    %v785 = vpop.trf.xlu0
    %v786 = vpop.trf.xlu0
    %v787 = vpop.trf.xlu0
    %v788 = vpop.trf.xlu0
    %v789 = vpop.trf.xlu0
    %v790 = vpop.trf.xlu0
    %v791 = vpop.trf.xlu0
    %v792 = vpop.trf.xlu0
    %v793 = vpop.trf.xlu0
    %v794 = vpop.trf.xlu0
    %v795 = vpop.trf.xlu0
    %v796 = vpop.trf.xlu0
    %798 = vset.pattern.permute.xlu0 0
    %799 = vperm.xlu0 %798, %v755
    %v800 = vpop.permute.xlu0 %799
    %803 = vset.pattern.permute.xlu0 0
    %804 = vperm.xlu0 %803, %v756
    %v805 = vpop.permute.xlu0 %804
    %v807 = vperm.slane %v781, 0
    %v808 = vmul.f32 %v800, %v807
    %v809 = vmul.f32 %v805, %v807
    %810 = vrot.lane.b32.xlu0 %v755, 127
    %v811 = vpop.permute.xlu0 %810
    %812 = vrot.lane.b32.xlu0 %v756, 127
    %v813 = vpop.permute.xlu0 %812
    %816 = vxpose.xlu0.b32.start [1/16] %v811, 128
    %817 = vxpose.xlu0.b32.cont [2/16] %v813, 128
    %818 = vxpose.xlu0.b32.cont [3/16] 0.0, 128
    %819 = vxpose.xlu0.b32.cont [4/16] 0.0, 128
    %820 = vxpose.xlu0.b32.cont [5/16] 0.0, 128
    %821 = vxpose.xlu0.b32.cont [6/16] 0.0, 128
    %822 = vxpose.xlu0.b32.cont [7/16] 0.0, 128
    %823 = vxpose.xlu0.b32.cont [8/16] 0.0, 128
    %824 = vxpose.xlu0.b32.cont [9/16] 0.0, 128
    %825 = vxpose.xlu0.b32.cont [10/16] 0.0, 128
    %826 = vxpose.xlu0.b32.cont [11/16] 0.0, 128
    %827 = vxpose.xlu0.b32.cont [12/16] 0.0, 128
    %828 = vxpose.xlu0.b32.cont [13/16] 0.0, 128
    %829 = vxpose.xlu0.b32.cont [14/16] 0.0, 128
    %830 = vxpose.xlu0.b32.cont [15/16] 0.0, 128
    %831 = vxpose.xlu0.b32.end [16/16] 0.0, 128
    %v832 = vpop.trf.xlu0
    %v833 = vpop.trf.xlu0
    %v834 = vpop.trf.xlu0
    %v835 = vpop.trf.xlu0
    %v836 = vpop.trf.xlu0
    %v837 = vpop.trf.xlu0
    %v838 = vpop.trf.xlu0
    %v839 = vpop.trf.xlu0
    %v840 = vpop.trf.xlu0
    %v841 = vpop.trf.xlu0
    %v842 = vpop.trf.xlu0
    %v843 = vpop.trf.xlu0
    %v844 = vpop.trf.xlu0
    %v845 = vpop.trf.xlu0
    %v846 = vpop.trf.xlu0
    %v847 = vpop.trf.xlu0
    %848 = vset.pattern.permute.xlu0 1
    %849 = vperm.xlu0 %848, %v755
    %v850 = vpop.permute.xlu0 %849
    %852 = vset.pattern.permute.xlu0 1
    %853 = vperm.xlu0 %852, %v756
    %v854 = vpop.permute.xlu0 %853
    %v856 = vperm.slane %v832, 0
    %v857 = vmul.f32 %v850, %v856
    %v858 = vmul.f32 %v854, %v856
    %v859 = vadd.f32 %v808, %v857
    %v860 = vadd.f32 %v809, %v858
    %v861 = vmul.f32 %v859, 2.0
    %v862 = vmul.f32 %v860, 2.0
    %v863 = vsub.f32 %v761, %v861
    %v864 = vsub.f32 %v764, %v862
    %865 = vxpose.xlu0.b32.start [1/16] %v761, 128
    %866 = vxpose.xlu0.b32.cont [2/16] %v764, 128
    %867 = vxpose.xlu0.b32.cont [3/16] 0.0, 128
    %868 = vxpose.xlu0.b32.cont [4/16] 0.0, 128
    %869 = vxpose.xlu0.b32.cont [5/16] 0.0, 128
    %870 = vxpose.xlu0.b32.cont [6/16] 0.0, 128
    %871 = vxpose.xlu0.b32.cont [7/16] 0.0, 128
    %872 = vxpose.xlu0.b32.cont [8/16] 0.0, 128
    %873 = vxpose.xlu0.b32.cont [9/16] 0.0, 128
    %874 = vxpose.xlu0.b32.cont [10/16] 0.0, 128
    %875 = vxpose.xlu0.b32.cont [11/16] 0.0, 128
    %876 = vxpose.xlu0.b32.cont [12/16] 0.0, 128
    %877 = vxpose.xlu0.b32.cont [13/16] 0.0, 128
    %878 = vxpose.xlu0.b32.cont [14/16] 0.0, 128
    %879 = vxpose.xlu0.b32.cont [15/16] 0.0, 128
    %880 = vxpose.xlu0.b32.end [16/16] 0.0, 128
    %v881 = vpop.trf.xlu0
    %v882 = vpop.trf.xlu0
    %v883 = vpop.trf.xlu0
    %v884 = vpop.trf.xlu0
    %v885 = vpop.trf.xlu0
    %v886 = vpop.trf.xlu0
    %v887 = vpop.trf.xlu0
    %v888 = vpop.trf.xlu0
    %v889 = vpop.trf.xlu0
    %v890 = vpop.trf.xlu0
    %v891 = vpop.trf.xlu0
    %v892 = vpop.trf.xlu0
    %v893 = vpop.trf.xlu0
    %v894 = vpop.trf.xlu0
    %v895 = vpop.trf.xlu0
    %v896 = vpop.trf.xlu0
    %v897 = vperm.slane %v881, 0
    %v898 = vadd.f32 %v863, %v897
    %v899 = vadd.f32 %v864, %v897
    %s900 = scalar_lea.vmem [#allocation2], 80
    %901 = vst.msk [vmem:[%s900] sm:$0xff] %vm155, %v898
    %902 = vst.msk [vmem:[%s900 + $0x8] sm:$0xff] %vm155, %v899
    %s903 = scalar_lea.vmem %s0, 96
    %v904 = vld [vmem:[%s903] sm:$0xff]
    %v905 = vld [vmem:[%s903 + $0x8] sm:$0xff]
    %v906 = vmul.f32 %v904, %v904
    %v907 = vmul.f32 %v905, %v905
    %v908 = vsel %vm13, %v906, 0.0
    %909 = vadd.xlane.f32.xlu0 %v908
    %v910 = vpop.xlane.xlu0 %909
    %v911 = vsel %vm13, %v907, 0.0
    %912 = vadd.xlane.f32.xlu0 %v911
    %v913 = vpop.xlane.xlu0 %912
    %914 = vxpose.xlu0.b32.start [1/16] %v904, 128
    %915 = vxpose.xlu0.b32.cont [2/16] %v905, 128
    %916 = vxpose.xlu0.b32.cont [3/16] 0.0, 128
    %917 = vxpose.xlu0.b32.cont [4/16] 0.0, 128
    %918 = vxpose.xlu0.b32.cont [5/16] 0.0, 128
    %919 = vxpose.xlu0.b32.cont [6/16] 0.0, 128
    %920 = vxpose.xlu0.b32.cont [7/16] 0.0, 128
    %921 = vxpose.xlu0.b32.cont [8/16] 0.0, 128
    %922 = vxpose.xlu0.b32.cont [9/16] 0.0, 128
    %923 = vxpose.xlu0.b32.cont [10/16] 0.0, 128
    %924 = vxpose.xlu0.b32.cont [11/16] 0.0, 128
    %925 = vxpose.xlu0.b32.cont [12/16] 0.0, 128
    %926 = vxpose.xlu0.b32.cont [13/16] 0.0, 128
    %927 = vxpose.xlu0.b32.cont [14/16] 0.0, 128
    %928 = vxpose.xlu0.b32.cont [15/16] 0.0, 128
    %929 = vxpose.xlu0.b32.end [16/16] 0.0, 128
    %v930 = vpop.trf.xlu0
    %v931 = vpop.trf.xlu0
    %v932 = vpop.trf.xlu0
    %v933 = vpop.trf.xlu0
    %v934 = vpop.trf.xlu0
    %v935 = vpop.trf.xlu0
    %v936 = vpop.trf.xlu0
    %v937 = vpop.trf.xlu0
    %v938 = vpop.trf.xlu0
    %v939 = vpop.trf.xlu0
    %v940 = vpop.trf.xlu0
    %v941 = vpop.trf.xlu0
    %v942 = vpop.trf.xlu0
    %v943 = vpop.trf.xlu0
    %v944 = vpop.trf.xlu0
    %v945 = vpop.trf.xlu0
    %947 = vset.pattern.permute.xlu0 0
    %948 = vperm.xlu0 %947, %v904
    %v949 = vpop.permute.xlu0 %948
    %952 = vset.pattern.permute.xlu0 0
    %953 = vperm.xlu0 %952, %v905
    %v954 = vpop.permute.xlu0 %953
    %v956 = vperm.slane %v930, 0
    %v957 = vmul.f32 %v949, %v956
    %v958 = vmul.f32 %v954, %v956
    %959 = vrot.lane.b32.xlu0 %v904, 127
    %v960 = vpop.permute.xlu0 %959
    %961 = vrot.lane.b32.xlu0 %v905, 127
    %v962 = vpop.permute.xlu0 %961
    %965 = vxpose.xlu0.b32.start [1/16] %v960, 128
    %966 = vxpose.xlu0.b32.cont [2/16] %v962, 128
    %967 = vxpose.xlu0.b32.cont [3/16] 0.0, 128
    %968 = vxpose.xlu0.b32.cont [4/16] 0.0, 128
    %969 = vxpose.xlu0.b32.cont [5/16] 0.0, 128
    %970 = vxpose.xlu0.b32.cont [6/16] 0.0, 128
    %971 = vxpose.xlu0.b32.cont [7/16] 0.0, 128
    %972 = vxpose.xlu0.b32.cont [8/16] 0.0, 128
    %973 = vxpose.xlu0.b32.cont [9/16] 0.0, 128
    %974 = vxpose.xlu0.b32.cont [10/16] 0.0, 128
    %975 = vxpose.xlu0.b32.cont [11/16] 0.0, 128
    %976 = vxpose.xlu0.b32.cont [12/16] 0.0, 128
    %977 = vxpose.xlu0.b32.cont [13/16] 0.0, 128
    %978 = vxpose.xlu0.b32.cont [14/16] 0.0, 128
    %979 = vxpose.xlu0.b32.cont [15/16] 0.0, 128
    %980 = vxpose.xlu0.b32.end [16/16] 0.0, 128
    %v981 = vpop.trf.xlu0
    %v982 = vpop.trf.xlu0
    %v983 = vpop.trf.xlu0
    %v984 = vpop.trf.xlu0
    %v985 = vpop.trf.xlu0
    %v986 = vpop.trf.xlu0
    %v987 = vpop.trf.xlu0
    %v988 = vpop.trf.xlu0
    %v989 = vpop.trf.xlu0
    %v990 = vpop.trf.xlu0
    %v991 = vpop.trf.xlu0
    %v992 = vpop.trf.xlu0
    %v993 = vpop.trf.xlu0
    %v994 = vpop.trf.xlu0
    %v995 = vpop.trf.xlu0
    %v996 = vpop.trf.xlu0
    %997 = vset.pattern.permute.xlu0 1
    %998 = vperm.xlu0 %997, %v904
    %v999 = vpop.permute.xlu0 %998
    %1001 = vset.pattern.permute.xlu0 1
    %1002 = vperm.xlu0 %1001, %v905
    %v1003 = vpop.permute.xlu0 %1002
    %v1005 = vperm.slane %v981, 0
    %v1006 = vmul.f32 %v999, %v1005
    %v1007 = vmul.f32 %v1003, %v1005
    %v1008 = vadd.f32 %v957, %v1006
    %v1009 = vadd.f32 %v958, %v1007
    %v1010 = vmul.f32 %v1008, 2.0
    %v1011 = vmul.f32 %v1009, 2.0
    %v1012 = vsub.f32 %v910, %v1010
    %v1013 = vsub.f32 %v913, %v1011
    %1014 = vxpose.xlu0.b32.start [1/16] %v910, 128
    %1015 = vxpose.xlu0.b32.cont [2/16] %v913, 128
    %1016 = vxpose.xlu0.b32.cont [3/16] 0.0, 128
    %1017 = vxpose.xlu0.b32.cont [4/16] 0.0, 128
    %1018 = vxpose.xlu0.b32.cont [5/16] 0.0, 128
    %1019 = vxpose.xlu0.b32.cont [6/16] 0.0, 128
    %1020 = vxpose.xlu0.b32.cont [7/16] 0.0, 128
    %1021 = vxpose.xlu0.b32.cont [8/16] 0.0, 128
    %1022 = vxpose.xlu0.b32.cont [9/16] 0.0, 128
    %1023 = vxpose.xlu0.b32.cont [10/16] 0.0, 128
    %1024 = vxpose.xlu0.b32.cont [11/16] 0.0, 128
    %1025 = vxpose.xlu0.b32.cont [12/16] 0.0, 128
    %1026 = vxpose.xlu0.b32.cont [13/16] 0.0, 128
    %1027 = vxpose.xlu0.b32.cont [14/16] 0.0, 128
    %1028 = vxpose.xlu0.b32.cont [15/16] 0.0, 128
    %1029 = vxpose.xlu0.b32.end [16/16] 0.0, 128
    %v1030 = vpop.trf.xlu0
    %v1031 = vpop.trf.xlu0
    %v1032 = vpop.trf.xlu0
    %v1033 = vpop.trf.xlu0
    %v1034 = vpop.trf.xlu0
    %v1035 = vpop.trf.xlu0
    %v1036 = vpop.trf.xlu0
    %v1037 = vpop.trf.xlu0
    %v1038 = vpop.trf.xlu0
    %v1039 = vpop.trf.xlu0
    %v1040 = vpop.trf.xlu0
    %v1041 = vpop.trf.xlu0
    %v1042 = vpop.trf.xlu0
    %v1043 = vpop.trf.xlu0
    %v1044 = vpop.trf.xlu0
    %v1045 = vpop.trf.xlu0
    %v1046 = vperm.slane %v1030, 0
    %v1047 = vadd.f32 %v1012, %v1046
    %v1048 = vadd.f32 %v1013, %v1046
    %s1049 = scalar_lea.vmem [#allocation2], 96
    %1050 = vst.msk [vmem:[%s1049] sm:$0xff] %vm155, %v1047
    %1051 = vst.msk [vmem:[%s1049 + $0x8] sm:$0xff] %vm155, %v1048
    %s1052 = scalar_lea.vmem %s0, 112
    %v1053 = vld [vmem:[%s1052] sm:$0xff]
    %v1054 = vld [vmem:[%s1052 + $0x8] sm:$0xff]
    %v1055 = vmul.f32 %v1053, %v1053
    %v1056 = vmul.f32 %v1054, %v1054
    %v1057 = vsel %vm13, %v1055, 0.0
    %1058 = vadd.xlane.f32.xlu0 %v1057
    %v1059 = vpop.xlane.xlu0 %1058
    %v1060 = vsel %vm13, %v1056, 0.0
    %1061 = vadd.xlane.f32.xlu0 %v1060
    %v1062 = vpop.xlane.xlu0 %1061
    %1063 = vxpose.xlu0.b32.start [1/16] %v1053, 128
    %1064 = vxpose.xlu0.b32.cont [2/16] %v1054, 128
    %1065 = vxpose.xlu0.b32.cont [3/16] 0.0, 128
    %1066 = vxpose.xlu0.b32.cont [4/16] 0.0, 128
    %1067 = vxpose.xlu0.b32.cont [5/16] 0.0, 128
    %1068 = vxpose.xlu0.b32.cont [6/16] 0.0, 128
    %1069 = vxpose.xlu0.b32.cont [7/16] 0.0, 128
    %1070 = vxpose.xlu0.b32.cont [8/16] 0.0, 128
    %1071 = vxpose.xlu0.b32.cont [9/16] 0.0, 128
    %1072 = vxpose.xlu0.b32.cont [10/16] 0.0, 128
    %1073 = vxpose.xlu0.b32.cont [11/16] 0.0, 128
    %1074 = vxpose.xlu0.b32.cont [12/16] 0.0, 128
    %1075 = vxpose.xlu0.b32.cont [13/16] 0.0, 128
    %1076 = vxpose.xlu0.b32.cont [14/16] 0.0, 128
    %1077 = vxpose.xlu0.b32.cont [15/16] 0.0, 128
    %1078 = vxpose.xlu0.b32.end [16/16] 0.0, 128
    %v1079 = vpop.trf.xlu0
    %v1080 = vpop.trf.xlu0
    %v1081 = vpop.trf.xlu0
    %v1082 = vpop.trf.xlu0
    %v1083 = vpop.trf.xlu0
    %v1084 = vpop.trf.xlu0
    %v1085 = vpop.trf.xlu0
    %v1086 = vpop.trf.xlu0
    %v1087 = vpop.trf.xlu0
    %v1088 = vpop.trf.xlu0
    %v1089 = vpop.trf.xlu0
    %v1090 = vpop.trf.xlu0
    %v1091 = vpop.trf.xlu0
    %v1092 = vpop.trf.xlu0
    %v1093 = vpop.trf.xlu0
    %v1094 = vpop.trf.xlu0
    %1096 = vset.pattern.permute.xlu0 0
    %1097 = vperm.xlu0 %1096, %v1053
    %v1098 = vpop.permute.xlu0 %1097
    %1101 = vset.pattern.permute.xlu0 0
    %1102 = vperm.xlu0 %1101, %v1054
    %v1103 = vpop.permute.xlu0 %1102
    %v1105 = vperm.slane %v1079, 0
    %v1106 = vmul.f32 %v1098, %v1105
    %v1107 = vmul.f32 %v1103, %v1105
    %1108 = vrot.lane.b32.xlu0 %v1053, 127
    %v1109 = vpop.permute.xlu0 %1108
    %1110 = vrot.lane.b32.xlu0 %v1054, 127
    %v1111 = vpop.permute.xlu0 %1110
    %1114 = vxpose.xlu0.b32.start [1/16] %v1109, 128
    %1115 = vxpose.xlu0.b32.cont [2/16] %v1111, 128
    %1116 = vxpose.xlu0.b32.cont [3/16] 0.0, 128
    %1117 = vxpose.xlu0.b32.cont [4/16] 0.0, 128
    %1118 = vxpose.xlu0.b32.cont [5/16] 0.0, 128
    %1119 = vxpose.xlu0.b32.cont [6/16] 0.0, 128
    %1120 = vxpose.xlu0.b32.cont [7/16] 0.0, 128
    %1121 = vxpose.xlu0.b32.cont [8/16] 0.0, 128
    %1122 = vxpose.xlu0.b32.cont [9/16] 0.0, 128
    %1123 = vxpose.xlu0.b32.cont [10/16] 0.0, 128
    %1124 = vxpose.xlu0.b32.cont [11/16] 0.0, 128
    %1125 = vxpose.xlu0.b32.cont [12/16] 0.0, 128
    %1126 = vxpose.xlu0.b32.cont [13/16] 0.0, 128
    %1127 = vxpose.xlu0.b32.cont [14/16] 0.0, 128
    %1128 = vxpose.xlu0.b32.cont [15/16] 0.0, 128
    %1129 = vxpose.xlu0.b32.end [16/16] 0.0, 128
    %v1130 = vpop.trf.xlu0
    %v1131 = vpop.trf.xlu0
    %v1132 = vpop.trf.xlu0
    %v1133 = vpop.trf.xlu0
    %v1134 = vpop.trf.xlu0
    %v1135 = vpop.trf.xlu0
    %v1136 = vpop.trf.xlu0
    %v1137 = vpop.trf.xlu0
    %v1138 = vpop.trf.xlu0
    %v1139 = vpop.trf.xlu0
    %v1140 = vpop.trf.xlu0
    %v1141 = vpop.trf.xlu0
    %v1142 = vpop.trf.xlu0
    %v1143 = vpop.trf.xlu0
    %v1144 = vpop.trf.xlu0
    %v1145 = vpop.trf.xlu0
    %1146 = vset.pattern.permute.xlu0 1
    %1147 = vperm.xlu0 %1146, %v1053
    %v1148 = vpop.permute.xlu0 %1147
    %1150 = vset.pattern.permute.xlu0 1
    %1151 = vperm.xlu0 %1150, %v1054
    %v1152 = vpop.permute.xlu0 %1151
    %v1154 = vperm.slane %v1130, 0
    %v1155 = vmul.f32 %v1148, %v1154
    %v1156 = vmul.f32 %v1152, %v1154
    %v1157 = vadd.f32 %v1106, %v1155
    %v1158 = vadd.f32 %v1107, %v1156
    %v1159 = vmul.f32 %v1157, 2.0
    %v1160 = vmul.f32 %v1158, 2.0
    %v1161 = vsub.f32 %v1059, %v1159
    %v1162 = vsub.f32 %v1062, %v1160
    %1163 = vxpose.xlu0.b32.start [1/16] %v1059, 128
    %1164 = vxpose.xlu0.b32.cont [2/16] %v1062, 128
    %1165 = vxpose.xlu0.b32.cont [3/16] 0.0, 128
    %1166 = vxpose.xlu0.b32.cont [4/16] 0.0, 128
    %1167 = vxpose.xlu0.b32.cont [5/16] 0.0, 128
    %1168 = vxpose.xlu0.b32.cont [6/16] 0.0, 128
    %1169 = vxpose.xlu0.b32.cont [7/16] 0.0, 128
    %1170 = vxpose.xlu0.b32.cont [8/16] 0.0, 128
    %1171 = vxpose.xlu0.b32.cont [9/16] 0.0, 128
    %1172 = vxpose.xlu0.b32.cont [10/16] 0.0, 128
    %1173 = vxpose.xlu0.b32.cont [11/16] 0.0, 128
    %1174 = vxpose.xlu0.b32.cont [12/16] 0.0, 128
    %1175 = vxpose.xlu0.b32.cont [13/16] 0.0, 128
    %1176 = vxpose.xlu0.b32.cont [14/16] 0.0, 128
    %1177 = vxpose.xlu0.b32.cont [15/16] 0.0, 128
    %1178 = vxpose.xlu0.b32.end [16/16] 0.0, 128
    %v1179 = vpop.trf.xlu0
    %v1180 = vpop.trf.xlu0
    %v1181 = vpop.trf.xlu0
    %v1182 = vpop.trf.xlu0
    %v1183 = vpop.trf.xlu0
    %v1184 = vpop.trf.xlu0
    %v1185 = vpop.trf.xlu0
    %v1186 = vpop.trf.xlu0
    %v1187 = vpop.trf.xlu0
    %v1188 = vpop.trf.xlu0
    %v1189 = vpop.trf.xlu0
    %v1190 = vpop.trf.xlu0
    %v1191 = vpop.trf.xlu0
    %v1192 = vpop.trf.xlu0
    %v1193 = vpop.trf.xlu0
    %v1194 = vpop.trf.xlu0
    %v1195 = vperm.slane %v1179, 0
    %v1196 = vadd.f32 %v1161, %v1195
    %v1197 = vadd.f32 %v1162, %v1195
    %s1198 = scalar_lea.vmem [#allocation2], 112
    %1199 = vst.msk [vmem:[%s1198] sm:$0xff] %vm155, %v1196
    %1200 = vst.msk [vmem:[%s1198 + $0x8] sm:$0xff] %vm155, %v1197
    // Predicated region
    $region6: #{tpu_custom_call.1} parent=1 // pred_check
      _
    $region7: #{tpu_custom_call.1} parent=1 // pred_check_branch
      %1202 = sbr.rel (0) target = $region9
    $region8: #{tpu_custom_call.1} parent=1 // pred_region
      %1204 = vsyncadd [#allocation3], 0
      %s1205 = sshll.u32 [#allocation2], 4
      %s1206 = int_to_ptr.vmem [resolvable:$true] %s1205
      %s1207 = sshll.u32 %s1, 4
      %s1208 = int_to_ptr.hbm [resolvable:$true] %s1207
      %1213 = dma.vmem_to_hbm [thread:$0]  %s1206, 2048, %s1208, [#allocation3], 128, 128, 8
    $region9: #{tpu_custom_call.1} parent=1 // pred_fallthru
      _
    // Predicated region
    $region10: #{tpu_custom_call.1} parent=1 // pred_check
      _
    $region11: #{tpu_custom_call.1} parent=1 // pred_check_branch
      %1215 = sbr.rel (0) target = $region13
    $region12: #{tpu_custom_call.1} parent=1 // pred_region
      %1217 = dma.done [#allocation3], 2048
    $region13: #{tpu_custom_call.1} parent=1 // pred_fallthru
      _
    %1218 = vsyncpa [#allocation3], 1

</llo_original>
